<compile_context>
chip_gen: v7x
topology: tpu7x:2x2x1
jax: 0.10.0
libtpu: 0.0.40
codegen_flags: <defaults>
</compile_context>

<pallas_src>
import math
import functools

import jax
import jax.numpy as jnp
from jax.experimental import pallas as pl
from jax.experimental.pallas import tpu as pltpu


# ------------------------------ VMEM budgeting ------------------------------


def _vmem_budget_bytes():
    """~75% of physical VMEM: ~48 MiB on v7x, ~96 MiB on v5e/v6e.

    Used both to pick tile sizes and as CompilerParams.vmem_limit_bytes so the
    chosen blocks actually fit (default scoped limits are only 16/32 MiB).
    """
    phys = 64 * 1024 * 1024            # conservative fallback (v7x per-core VMEM)
    try:
        phys = int(pltpu.get_tpu_info().vmem_capacity_bytes)
    except Exception:
        pass
    return (phys * 3) // 4


def _divisor_candidates(dim, candidates):
    cands = [c for c in candidates if dim % c == 0]
    return cands if cands else [dim]


# ------------------ stacked linear:  y[p] = x @ w[p] + b[p] -----------------


def _linear_kernel(x_ref, w_ref, b_ref, o_ref, acc_ref):
    # x: (tm, tk), w: (tk, tn), b: (1, tn), o: (tm, tn), acc: (tm, tn) f32.
    @pl.when(pl.program_id(3) == 0)
    def _init():
        acc_ref[...] = jnp.zeros_like(acc_ref)

    acc_ref[...] += jnp.dot(x_ref[...], w_ref[...],
                            preferred_element_type=jnp.float32)

    @pl.when(pl.program_id(3) == pl.num_programs(3) - 1)
    def _finalize():
        o_ref[...] = (acc_ref[...] + b_ref[...].astype(jnp.float32)
                      ).astype(o_ref.dtype)


def _linear_tiles(M, N, K, itemsize, budget):
    """Largest (tm, tn, tk) whose double-buffered blocks fit the VMEM budget."""
    def cost(tm, tn, tk):
        return (2 * tm * tk * itemsize        # x block, double buffered
                + 2 * tk * tn * itemsize      # w block, double buffered
                + 2 * tm * tn * itemsize      # out block, double buffered
                + 4 * tn * itemsize           # bias
                + tm * tn * 4)                # f32 accumulator scratch
    tm_c = _divisor_candidates(M, (512, 256, 128, 64, 32, 16, 8))
    tn_c = _divisor_candidates(N, (1024, 512, 256, 128))
    tk_c = _divisor_candidates(K, (1024, 512, 256, 128))
    for tm in tm_c:
        for tn in tn_c:
            for tk in tk_c:
                if cost(tm, tn, tk) <= budget:
                    return tm, tn, tk
    return tm_c[-1], tn_c[-1], tk_c[-1]


def _stacked_linear(x, w, b, *, vmem_budget):
    """y[p] = x @ w[p] + b[p].   x: (M, K), w: (P, K, N), b: (P, 1, N).

    Returns (P, M, N).  Weights are pre-stacked at parameter-prep time, so no
    per-call HBM concatenation happens inside the jitted forward.
    """
    M, K = x.shape
    P, K2, N = w.shape
    assert K == K2 and b.shape == (P, 1, N)
    tm, tn, tk = _linear_tiles(M, N, K, x.dtype.itemsize, vmem_budget)

    return pl.pallas_call(
        _linear_kernel,
        out_shape=jax.ShapeDtypeStruct((P, M, N), x.dtype),
        grid=(P, M // tm, N // tn, K // tk),
        in_specs=[
            pl.BlockSpec((tm, tk), lambda p, i, j, k: (i, k)),
            pl.BlockSpec((None, tk, tn), lambda p, i, j, k: (p, k, j)),
            pl.BlockSpec((None, 1, tn), lambda p, i, j, k: (p, 0, j)),
        ],
        out_specs=pl.BlockSpec((None, tm, tn), lambda p, i, j, k: (p, i, j)),
        scratch_shapes=[pltpu.VMEM((tm, tn), jnp.float32)],
        compiler_params=pltpu.CompilerParams(
            dimension_semantics=("parallel", "parallel", "parallel",
                                 "arbitrary"),
            vmem_limit_bytes=vmem_budget),
    )(x, w, b)


# ----------------- flash-style multi-head attention kernel ------------------


def _attention_tiles(B, S, hidden, head_num, itemsize, budget):
    """Largest tq that fits the VMEM budget; shrink tkv before tq (tkv drives
    both the streamed K/V buffers and the (tq, tkv) f32 score intermediates).
    """
    def cost(tq, tkv):
        return (2 * tq * hidden * itemsize            # Q block (double buffered)
                + 2 * 2 * tkv * hidden * itemsize     # K + V blocks
                + 2 * tq * hidden * itemsize          # output block
                + tq * hidden * 4                     # f32 acc scratch
                + 2 * tq * 128 * 4                    # m / l scratch (lane-padded)
                + 2 * head_num * tq * tkv * 4)        # scores + probs (f32)

    tq_c = _divisor_candidates(S, (512, 256, 128, 64, 32, 16, 8))
    tkv_c = _divisor_candidates(S, (1024, 512, 256, 128, 64, 32, 16, 8))
    tq, tkv = tq_c[-1], tkv_c[-1]
    found = False
    for cand_q in tq_c:
        for cand_kv in tkv_c:
            if cost(cand_q, cand_kv) <= budget:
                tq, tkv = cand_q, cand_kv
                found = True
                break
        if found:
            break
    # Megacore balance: ensure at least two (batch, q-tile) parallel units so
    # both TensorCores on v7x get work.
    while B * (S // tq) < 2 and tq > 8 and tq % 2 == 0 and S % (tq // 2) == 0:
        tq //= 2
    return tq, tkv


def _attention_kernel(q_ref, k_ref, v_ref, o_ref, m_ref, l_ref, acc_ref, *,
                      head_num, head_dim, scale):
    """Online-softmax attention for ALL heads of one (batch, q-tile).

    q_ref : (tq,  hidden)  Q rows (resident across the KV grid axis).
    k_ref : (tkv, hidden)  K rows (streamed along the KV axis).
    v_ref : (tkv, hidden)  V rows (streamed along the KV axis).
    o_ref : (tq,  hidden)  per-head outputs packed along lanes (lane-dense).
    m_ref/l_ref : (tq, head_num) f32 running max / sum (heads along lanes).
    acc_ref     : (tq, hidden)   f32 output accumulator.
    """
    H, D = head_num, head_dim
    ki = pl.program_id(2)

    @pl.when(ki == 0)
    def _init():
        m_ref[...] = jnp.full_like(m_ref, -jnp.inf)
        l_ref[...] = jnp.zeros_like(l_ref)
        acc_ref[...] = jnp.zeros_like(acc_ref)

    # Scale q once (tq*hidden elements, not tq*tkv*H score elements).
    q = q_ref[...] * scale
    k = k_ref[...]
    v = v_ref[...]

    # Phase 1: QK^T for every head -- MXU pushes back-to-back, no per-head
    # softmax interleaved between them.  f32 accumulation on the MXU.
    dims = (((1,), (1,)), ((), ()))
    scores = [jax.lax.dot_general(q[:, h * D:(h + 1) * D],
                                  k[:, h * D:(h + 1) * D], dims,
                                  preferred_element_type=jnp.float32)
              for h in range(H)]                               # H x (tq, tkv)

    # Phase 2: online-softmax statistics, heads packed along lanes -> (tq, H).
    m_prev = m_ref[...]
    l_prev = l_ref[...]
    m_cur = jnp.concatenate(
        [jnp.max(s, axis=-1, keepdims=True) for s in scores], axis=-1)
    m_new = jnp.maximum(m_prev, m_cur)                         # (tq, H)
    alpha = jnp.exp(m_prev - m_new)                            # (tq, H)
    probs = [jnp.exp(scores[h] - m_new[:, h:h + 1]) for h in range(H)]
    l_ref[...] = alpha * l_prev + jnp.concatenate(
        [jnp.sum(p, axis=-1, keepdims=True) for p in probs], axis=-1)
    m_ref[...] = m_new

    # Phase 3: P @ V for every head -- back-to-back MXU pushes -- then one
    # full-width lane-dense accumulator update.
    pv = [jnp.dot(probs[h].astype(v.dtype), v[:, h * D:(h + 1) * D],
                  preferred_element_type=jnp.float32) for h in range(H)]
    acc_prev = acc_ref[...]
    acc_ref[...] = jnp.concatenate(
        [alpha[:, h:h + 1] * acc_prev[:, h * D:(h + 1) * D] + pv[h]
         for h in range(H)], axis=-1)

    @pl.when(ki == pl.num_programs(2) - 1)
    def _finalize():
        # attention dropout: identity (eval mode).
        l = l_ref[...]
        inv = pl.reciprocal(l, approx=True)          # EUP slot
        inv = inv * (2.0 - l * inv)                  # one Newton step -> ~f32 exact
        acc = acc_ref[...]
        out = jnp.concatenate(
            [acc[:, h * D:(h + 1) * D] * inv[:, h:h + 1] for h in range(H)],
            axis=-1)
        o_ref[...] = out.astype(o_ref.dtype)         # single lane-dense store


def _attention(qkv, *, head_num, head_dim, vmem_budget):
    """qkv: (3, B, S, hidden) fused projections -> (B, S, hidden) attention.

    Output layout is the "normal" head packing out[b, s, h*D + d]; the
    module's quirky transpose(1, 3) view is applied by the caller.
    """
    P, B, S, hidden = qkv.shape
    assert P == 3 and hidden == head_num * head_dim
    scale = 1.0 / math.sqrt(head_dim)
    tq, tkv = _attention_tiles(B, S, hidden, head_num, qkv.dtype.itemsize,
                               vmem_budget)

    kernel = functools.partial(_attention_kernel, head_num=head_num,
                               head_dim=head_dim, scale=scale)
    # TODO(synk): pipeline_mode=pl.Buffered(1) on the resident Q block would
    #             save one (tq, hidden) VMEM buffer under v7x's 64 MiB cap.
    return pl.pallas_call(
        kernel,
        out_shape=jax.ShapeDtypeStruct((B, S, hidden), qkv.dtype),
        grid=(B, S // tq, S // tkv),
        in_specs=[
            # Q plane only (hidden columns, not 3*hidden), resident over ki.
            pl.BlockSpec((None, None, tq, hidden),
                         lambda b, qi, ki: (0, b, qi, 0)),
            # K / V planes, streamed along the KV axis: 2*hidden per step.
            pl.BlockSpec((None, None, tkv, hidden),
                         lambda b, qi, ki: (1, b, ki, 0)),
            pl.BlockSpec((None, None, tkv, hidden),
                         lambda b, qi, ki: (2, b, ki, 0)),
        ],
        out_specs=pl.BlockSpec((None, tq, hidden),
                               lambda b, qi, ki: (b, qi, 0)),
        scratch_shapes=[
            pltpu.VMEM((tq, head_num), jnp.float32),   # running max (lanes=heads)
            pltpu.VMEM((tq, head_num), jnp.float32),   # running sum (lanes=heads)
            pltpu.VMEM((tq, hidden), jnp.float32),     # output accumulator
        ],
        compiler_params=pltpu.CompilerParams(
            dimension_semantics=("parallel", "parallel", "arbitrary"),
            vmem_limit_bytes=vmem_budget),
    )(qkv, qkv, qkv)


# --------------------------- parameters & forward ----------------------------


def init_params(key, hidden_dim):
    """Deterministic torch.nn.Linear-style init: U(-1/sqrt(fan_in), +)."""
    ks = jax.random.split(key, 8)
    bound = 1.0 / math.sqrt(hidden_dim)

    def u(k, shape):
        return jax.random.uniform(k, shape, jnp.float32, -bound, bound)

    return {
        "wq": u(ks[0], (hidden_dim, hidden_dim)), "bq": u(ks[1], (hidden_dim,)),
        "wk": u(ks[2], (hidden_dim, hidden_dim)), "bk": u(ks[3], (hidden_dim,)),
        "wv": u(ks[4], (hidden_dim, hidden_dim)), "bv": u(ks[5], (hidden_dim,)),
        "wo": u(ks[6], (hidden_dim, hidden_dim)), "bo": u(ks[7], (hidden_dim,)),
    }


def prepare_params(params, dtype=None):
    """One-time weight fusion, done OUTSIDE the jitted forward.

    Avoids re-concatenating the (hidden, 3*hidden) QKV weight in HBM on every
    call.  Pass dtype=jnp.bfloat16 (and cast X) for MXU-native bf16 operands
    with f32 accumulation; kept f32 here to hold the 2e-4 reference tolerance.
    """
    w_qkv = jnp.stack([params["wq"], params["wk"], params["wv"]], axis=0)
    b_qkv = jnp.stack([params["bq"], params["bk"], params["bv"]],
                      axis=0)[:, None, :]
    prep = {
        "w_qkv": w_qkv,                     # (3, hidden, hidden)
        "b_qkv": b_qkv,                     # (3, 1, hidden)
        "wo": params["wo"][None],           # (1, hidden, hidden)
        "bo": params["bo"][None, None, :],  # (1, 1, hidden)
    }
    if dtype is not None:
        prep = {k: v.astype(dtype) for k, v in prep.items()}
    return prep


def multi_head_attention(X, prepared, head_num):
    """Forward pass of the reference module (attention_mask=None, eval mode)."""
    # TODO(synk): boolean attention_mask support (masked_fill(-inf) must be
    #             applied before the running-max update; handle all-masked rows).
    B, S, hidden = X.shape
    head_dim = hidden // head_num
    assert head_dim * head_num == hidden
    budget = _vmem_budget_bytes()

    # Fused QKV projection against the pre-stacked [wq | wk | wv] weight.
    qkv = _stacked_linear(X.reshape(B * S, hidden), prepared["w_qkv"],
                          prepared["b_qkv"], vmem_budget=budget)
    qkv = qkv.reshape(3, B, S, hidden)

    # Attention reads only the Q / K / V planes it needs (no 3*hidden waste).
    attn = _attention(qkv, head_num=head_num, head_dim=head_dim,
                      vmem_budget=budget)                     # (B, S, H*D)

    # Reproduce the reference's quirky
    #   output.transpose(1, 3).contiguous().view(B, S, H*D)
    # attn[b, s, h*D + d] == o[b, h, s, d]; the quirk views o as (B, D, S, H).
    # TODO(synk): optionally fold this permutation into the attention out_specs
    #             ((B, D, S, H) output layout) to drop the XLA transpose.
    out_perm = jnp.transpose(attn.reshape(B, S, head_num, head_dim),
                             (0, 3, 1, 2)).reshape(B, S, hidden)

    out = _stacked_linear(out_perm.reshape(B * S, hidden), prepared["wo"],
                          prepared["bo"], vmem_budget=budget)
    return out.reshape(B, S, hidden)


# Pure-JAX reference (mirrors the PyTorch forward) for correctness checking.
def _reference(X, params, head_num):
    B, S, hidden = X.shape
    head_dim = hidden // head_num
    Q = X @ params["wq"] + params["bq"]
    K = X @ params["wk"] + params["bk"]
    V = X @ params["wv"] + params["bv"]
    q = jnp.transpose(Q.reshape(B, S, head_num, head_dim), (0, 2, 1, 3))
    k = jnp.transpose(K.reshape(B, S, head_num, head_dim), (0, 2, 1, 3))
    v = jnp.transpose(V.reshape(B, S, head_num, head_dim), (0, 2, 1, 3))
    w = jnp.einsum("bhqd,bhkd->bhqk", q, k) / math.sqrt(head_dim)
    w = jax.nn.softmax(w, axis=-1)
    o = jnp.einsum("bhqk,bhkd->bhqd", w, v)
    o = jnp.transpose(o, (0, 3, 2, 1)).reshape(B, S, hidden)
    return o @ params["wo"] + params["bo"]


if __name__ == "__main__":
    B, S, hidden, heads = 2, 8, 32, 4

    key = jax.random.PRNGKey(0)
    kx, kp = jax.random.split(key)
    X = jax.random.normal(kx, (B, S, hidden), jnp.float32)
    params = init_params(kp, hidden)
    prepared = prepare_params(params)   # one-time weight fusion (outside jit)

    fn = jax.jit(functools.partial(multi_head_attention, head_num=heads))
    out = jax.block_until_ready(fn(X, prepared))

    ref = _reference(X, params, heads)
    assert out.shape == (B, S, hidden)
    assert jnp.allclose(out, ref, rtol=2e-4, atol=2e-4), "mismatch vs reference"

    print("KERNEL_OK")
</pallas_src>

<mosaic_0001>
module attributes {stable_mosaic.version = 11 : i64} {
  func.func @_linear_kernel(%arg0: i32, %arg1: i32, %arg2: i32, %arg3: i32, %arg4: memref<16x32xf32, #tpu.memory_space<vmem>>, %arg5: memref<1x32x32xf32, #tpu.memory_space<vmem>>, %arg6: memref<1x1x32xf32, #tpu.memory_space<vmem>>, %arg7: memref<1x16x32xf32, #tpu.memory_space<vmem>>, %arg8: memref<16x32xf32, #tpu.memory_space<vmem>>) attributes {dimension_semantics = [#tpu.dimension_semantics<parallel>, #tpu.dimension_semantics<parallel>, #tpu.dimension_semantics<parallel>, #tpu.dimension_semantics<arbitrary>], iteration_bounds = array<i64: 3, 1, 1, 1>, scalar_prefetch = 0 : i64, scratch_operands = 1 : i64, tpu.core_type = #tpu.core_type<tc>, window_params = [{transform_indices = @transform_0, window_bounds = array<i64: 16, 32>}, {transform_indices = @transform_1, window_bounds = array<i64: 1, 32, 32>}, {transform_indices = @transform_2, window_bounds = array<i64: 1, 1, 32>}, {transform_indices = @transform_3, window_bounds = array<i64: 1, 16, 32>}]} {
    %c0_i32 = arith.constant 0 : i32
    %0 = arith.cmpi eq, %arg3, %c0_i32 : i32
    %1 = arith.extui %0 : i1 to i32
    %c0_i32_0 = arith.constant 0 : i32
    %2 = arith.cmpi ne, %1, %c0_i32_0 : i32
    scf.if %2 {
      %cst_11 = arith.constant 0.000000e+00 : f32
      %13 = vector.broadcast %cst_11 : f32 to vector<16x32xf32>
      %c0_12 = arith.constant 0 : index
      %c0_13 = arith.constant 0 : index
      %14 = vector.load %arg8[%c0_12, %c0_13] : memref<16x32xf32, #tpu.memory_space<vmem>>, vector<16x32xf32>
      tpu.vector_store %arg8[%c0_12, %c0_13], %13 {strides = array<i32>} : memref<16x32xf32, #tpu.memory_space<vmem>>, vector<16x32xf32>,
    } else {
    }
    %c0 = arith.constant 0 : index
    %c0_1 = arith.constant 0 : index
    %3 = vector.load %arg8[%c0, %c0_1] : memref<16x32xf32, #tpu.memory_space<vmem>>, vector<16x32xf32>
    %c0_2 = arith.constant 0 : index
    %c0_3 = arith.constant 0 : index
    %4 = vector.load %arg4[%c0_2, %c0_3] : memref<16x32xf32, #tpu.memory_space<vmem>>, vector<16x32xf32>
    %c0_4 = arith.constant 0 : index
    %c0_5 = arith.constant 0 : index
    %c0_6 = arith.constant 0 : index
    %5 = vector.load %arg5[%c0_4, %c0_5, %c0_6] : memref<1x32x32xf32, #tpu.memory_space<vmem>>, vector<1x32x32xf32>
    %6 = vector.shape_cast %5 : vector<1x32x32xf32> to vector<32x32xf32>
    %cst = arith.constant dense<0.000000e+00> : vector<16x32xf32>
    %7 = tpu.matmul %4, %6, %cst {dimension_numbers = #tpu.dot_dimension_numbers<[1], [0], [0], [1], [0, 0, 1, 1], [], []>} : vector<16x32xf32>, vector<32x32xf32>, vector<16x32xf32> -> vector<16x32xf32>
    %8 = arith.addf %3, %7 : vector<16x32xf32>
    %c0_7 = arith.constant 0 : index
    %c0_8 = arith.constant 0 : index
    %9 = vector.load %arg8[%c0_7, %c0_8] : memref<16x32xf32, #tpu.memory_space<vmem>>, vector<16x32xf32>
    tpu.vector_store %arg8[%c0_7, %c0_8], %8 {strides = array<i32>} : memref<16x32xf32, #tpu.memory_space<vmem>>, vector<16x32xf32>,
    %c0_i32_9 = arith.constant 0 : i32
    %10 = arith.cmpi eq, %arg3, %c0_i32_9 : i32
    %11 = arith.extui %10 : i1 to i32
    %c0_i32_10 = arith.constant 0 : i32
    %12 = arith.cmpi ne, %11, %c0_i32_10 : i32
    scf.if %12 {
      %c0_11 = arith.constant 0 : index
      %c0_12 = arith.constant 0 : index
      %13 = vector.load %arg8[%c0_11, %c0_12] : memref<16x32xf32, #tpu.memory_space<vmem>>, vector<16x32xf32>
      %c0_13 = arith.constant 0 : index
      %c0_14 = arith.constant 0 : index
      %c0_15 = arith.constant 0 : index
      %14 = vector.load %arg6[%c0_13, %c0_14, %c0_15] : memref<1x1x32xf32, #tpu.memory_space<vmem>>, vector<1x1x32xf32>
      %15 = vector.shape_cast %14 : vector<1x1x32xf32> to vector<1x32xf32>
      %16 = vector.broadcast %15 : vector<1x32xf32> to vector<16x32xf32>
      %17 = arith.addf %13, %16 : vector<16x32xf32>
      %c0_16 = arith.constant 0 : index
      %c0_17 = arith.constant 0 : index
      %c0_18 = arith.constant 0 : index
      %18 = vector.load %arg7[%c0_16, %c0_17, %c0_18] : memref<1x16x32xf32, #tpu.memory_space<vmem>>, vector<1x16x32xf32>
      %19 = vector.shape_cast %18 : vector<1x16x32xf32> to vector<16x32xf32>
      %20 = vector.shape_cast %17 : vector<16x32xf32> to vector<1x16x32xf32>
      tpu.vector_store %arg7[%c0_16, %c0_17, %c0_18], %20 {strides = array<i32>} : memref<1x16x32xf32, #tpu.memory_space<vmem>>, vector<1x16x32xf32>,
    } else {
    }
    return
  }
  func.func @transform_0(%arg0: i32, %arg1: i32, %arg2: i32, %arg3: i32) -> (i32, i32) {
    %c0_i32 = arith.constant 0 : i32
    return %arg1, %arg3 : i32, i32
  }
  func.func @transform_1(%arg0: i32, %arg1: i32, %arg2: i32, %arg3: i32) -> (i32, i32, i32) {
    %c0_i32 = arith.constant 0 : i32
    return %arg0, %arg3, %arg2 : i32, i32, i32
  }
  func.func @transform_2(%arg0: i32, %arg1: i32, %arg2: i32, %arg3: i32) -> (i32, i32, i32) {
    %c0_i32 = arith.constant 0 : i32
    %c0_i32_0 = arith.constant 0 : i32
    return %arg0, %c0_i32, %arg2 : i32, i32, i32
  }
  func.func @transform_3(%arg0: i32, %arg1: i32, %arg2: i32, %arg3: i32) -> (i32, i32, i32) {
    %c0_i32 = arith.constant 0 : i32
    return %arg0, %arg1, %arg2 : i32, i32, i32
  }
}

module attributes {stable_mosaic.version = 11 : i64} {
  func.func @_attention_kernel(%arg0: i32, %arg1: i32, %arg2: i32, %arg3: memref<1x1x8x32xf32, #tpu.memory_space<vmem>>, %arg4: memref<1x1x8x32xf32, #tpu.memory_space<vmem>>, %arg5: memref<1x1x8x32xf32, #tpu.memory_space<vmem>>, %arg6: memref<1x8x32xf32, #tpu.memory_space<vmem>>, %arg7: memref<8x4xf32, #tpu.memory_space<vmem>>, %arg8: memref<8x4xf32, #tpu.memory_space<vmem>>, %arg9: memref<8x32xf32, #tpu.memory_space<vmem>>) attributes {dimension_semantics = [#tpu.dimension_semantics<parallel>, #tpu.dimension_semantics<parallel>, #tpu.dimension_semantics<arbitrary>], iteration_bounds = array<i64: 2, 1, 1>, scalar_prefetch = 0 : i64, scratch_operands = 3 : i64, tpu.core_type = #tpu.core_type<tc>, window_params = [{transform_indices = @transform_0, window_bounds = array<i64: 1, 1, 8, 32>}, {transform_indices = @transform_1, window_bounds = array<i64: 1, 1, 8, 32>}, {transform_indices = @transform_2, window_bounds = array<i64: 1, 1, 8, 32>}, {transform_indices = @transform_3, window_bounds = array<i64: 1, 8, 32>}]} {
    %c0_i32 = arith.constant 0 : i32
    %0 = arith.cmpi eq, %arg2, %c0_i32 : i32
    %1 = arith.extui %0 : i1 to i32
    %c0_i32_0 = arith.constant 0 : i32
    %2 = arith.cmpi ne, %1, %c0_i32_0 : i32
    scf.if %2 {
      %cst_42 = arith.constant 0xFF800000 : f32
      %100 = vector.broadcast %cst_42 : f32 to vector<8x4xf32>
      %c0_43 = arith.constant 0 : index
      %c0_44 = arith.constant 0 : index
      %101 = vector.load %arg7[%c0_43, %c0_44] : memref<8x4xf32, #tpu.memory_space<vmem>>, vector<8x4xf32>
      tpu.vector_store %arg7[%c0_43, %c0_44], %100 {strides = array<i32>} : memref<8x4xf32, #tpu.memory_space<vmem>>, vector<8x4xf32>,
      %cst_45 = arith.constant 0.000000e+00 : f32
      %102 = vector.broadcast %cst_45 : f32 to vector<8x4xf32>
      %c0_46 = arith.constant 0 : index
      %c0_47 = arith.constant 0 : index
      %103 = vector.load %arg8[%c0_46, %c0_47] : memref<8x4xf32, #tpu.memory_space<vmem>>, vector<8x4xf32>
      tpu.vector_store %arg8[%c0_46, %c0_47], %102 {strides = array<i32>} : memref<8x4xf32, #tpu.memory_space<vmem>>, vector<8x4xf32>,
      %cst_48 = arith.constant 0.000000e+00 : f32
      %104 = vector.broadcast %cst_48 : f32 to vector<8x32xf32>
      %c0_49 = arith.constant 0 : index
      %c0_50 = arith.constant 0 : index
      %105 = vector.load %arg9[%c0_49, %c0_50] : memref<8x32xf32, #tpu.memory_space<vmem>>, vector<8x32xf32>
      tpu.vector_store %arg9[%c0_49, %c0_50], %104 {strides = array<i32>} : memref<8x32xf32, #tpu.memory_space<vmem>>, vector<8x32xf32>,
    } else {
    }
    %c0 = arith.constant 0 : index
    %c0_1 = arith.constant 0 : index
    %c0_2 = arith.constant 0 : index
    %c0_3 = arith.constant 0 : index
    %3 = vector.load %arg3[%c0, %c0_1, %c0_2, %c0_3] : memref<1x1x8x32xf32, #tpu.memory_space<vmem>>, vector<1x1x8x32xf32>
    %4 = vector.shape_cast %3 : vector<1x1x8x32xf32> to vector<8x32xf32>
    %cst = arith.constant 0.353553385 : f32
    %5 = vector.broadcast %cst : f32 to vector<8x32xf32>
    %6 = arith.mulf %4, %5 : vector<8x32xf32>
    %c0_4 = arith.constant 0 : index
    %c0_5 = arith.constant 0 : index
    %c0_6 = arith.constant 0 : index
    %c0_7 = arith.constant 0 : index
    %7 = vector.load %arg4[%c0_4, %c0_5, %c0_6, %c0_7] : memref<1x1x8x32xf32, #tpu.memory_space<vmem>>, vector<1x1x8x32xf32>
    %8 = vector.shape_cast %7 : vector<1x1x8x32xf32> to vector<8x32xf32>
    %c0_8 = arith.constant 0 : index
    %c0_9 = arith.constant 0 : index
    %c0_10 = arith.constant 0 : index
    %c0_11 = arith.constant 0 : index
    %9 = vector.load %arg5[%c0_8, %c0_9, %c0_10, %c0_11] : memref<1x1x8x32xf32, #tpu.memory_space<vmem>>, vector<1x1x8x32xf32>
    %10 = vector.shape_cast %9 : vector<1x1x8x32xf32> to vector<8x32xf32>
    %11 = vector.extract_strided_slice %6 {offsets = [0, 0], sizes = [8, 8], strides = [1, 1]} : vector<8x32xf32> to vector<8x8xf32>
    %12 = vector.extract_strided_slice %8 {offsets = [0, 0], sizes = [8, 8], strides = [1, 1]} : vector<8x32xf32> to vector<8x8xf32>
    %cst_12 = arith.constant dense<0.000000e+00> : vector<8x8xf32>
    %13 = tpu.matmul %11, %12, %cst_12 {dimension_numbers = #tpu.dot_dimension_numbers<[1], [1], [0], [0], [0, 0, 1, 0], [], []>} : vector<8x8xf32>, vector<8x8xf32>, vector<8x8xf32> -> vector<8x8xf32>
    %14 = vector.extract_strided_slice %6 {offsets = [0, 8], sizes = [8, 8], strides = [1, 1]} : vector<8x32xf32> to vector<8x8xf32>
    %15 = vector.extract_strided_slice %8 {offsets = [0, 8], sizes = [8, 8], strides = [1, 1]} : vector<8x32xf32> to vector<8x8xf32>
    %cst_13 = arith.constant dense<0.000000e+00> : vector<8x8xf32>
    %16 = tpu.matmul %14, %15, %cst_13 {dimension_numbers = #tpu.dot_dimension_numbers<[1], [1], [0], [0], [0, 0, 1, 0], [], []>} : vector<8x8xf32>, vector<8x8xf32>, vector<8x8xf32> -> vector<8x8xf32>
    %17 = vector.extract_strided_slice %6 {offsets = [0, 16], sizes = [8, 8], strides = [1, 1]} : vector<8x32xf32> to vector<8x8xf32>
    %18 = vector.extract_strided_slice %8 {offsets = [0, 16], sizes = [8, 8], strides = [1, 1]} : vector<8x32xf32> to vector<8x8xf32>
    %cst_14 = arith.constant dense<0.000000e+00> : vector<8x8xf32>
    %19 = tpu.matmul %17, %18, %cst_14 {dimension_numbers = #tpu.dot_dimension_numbers<[1], [1], [0], [0], [0, 0, 1, 0], [], []>} : vector<8x8xf32>, vector<8x8xf32>, vector<8x8xf32> -> vector<8x8xf32>
    %20 = vector.extract_strided_slice %6 {offsets = [0, 24], sizes = [8, 8], strides = [1, 1]} : vector<8x32xf32> to vector<8x8xf32>
    %21 = vector.extract_strided_slice %8 {offsets = [0, 24], sizes = [8, 8], strides = [1, 1]} : vector<8x32xf32> to vector<8x8xf32>
    %cst_15 = arith.constant dense<0.000000e+00> : vector<8x8xf32>
    %22 = tpu.matmul %20, %21, %cst_15 {dimension_numbers = #tpu.dot_dimension_numbers<[1], [1], [0], [0], [0, 0, 1, 0], [], []>} : vector<8x8xf32>, vector<8x8xf32>, vector<8x8xf32> -> vector<8x8xf32>
    %c0_16 = arith.constant 0 : index
    %c0_17 = arith.constant 0 : index
    %23 = vector.load %arg7[%c0_16, %c0_17] : memref<8x4xf32, #tpu.memory_space<vmem>>, vector<8x4xf32>
    %c0_18 = arith.constant 0 : index
    %c0_19 = arith.constant 0 : index
    %24 = vector.load %arg8[%c0_18, %c0_19] : memref<8x4xf32, #tpu.memory_space<vmem>>, vector<8x4xf32>
    %cst_20 = arith.constant dense<0xFF800000> : vector<8xf32>
    %25 = vector.multi_reduction <maximumf>, %13, %cst_20 [1] : vector<8x8xf32> to vector<8xf32>
    %26 = vector.shape_cast %25 : vector<8xf32> to vector<8x1xf32>
    %cst_21 = arith.constant dense<0xFF800000> : vector<8xf32>
    %27 = vector.multi_reduction <maximumf>, %16, %cst_21 [1] : vector<8x8xf32> to vector<8xf32>
    %28 = vector.shape_cast %27 : vector<8xf32> to vector<8x1xf32>
    %cst_22 = arith.constant dense<0xFF800000> : vector<8xf32>
    %29 = vector.multi_reduction <maximumf>, %19, %cst_22 [1] : vector<8x8xf32> to vector<8xf32>
    %30 = vector.shape_cast %29 : vector<8xf32> to vector<8x1xf32>
    %cst_23 = arith.constant dense<0xFF800000> : vector<8xf32>
    %31 = vector.multi_reduction <maximumf>, %22, %cst_23 [1] : vector<8x8xf32> to vector<8xf32>
    %32 = vector.shape_cast %31 : vector<8xf32> to vector<8x1xf32>
    %33 = tpu.concatenate %26, %28, %30, %32 in 1 : vector<8x1xf32>, vector<8x1xf32>, vector<8x1xf32>, vector<8x1xf32> -> vector<8x4xf32>
    %34 = arith.maximumf %23, %33 : vector<8x4xf32>
    %35 = arith.subf %23, %34 : vector<8x4xf32>
    %36 = math.exp %35 : vector<8x4xf32>
    %37 = vector.extract_strided_slice %34 {offsets = [0, 0], sizes = [8, 1], strides = [1, 1]} : vector<8x4xf32> to vector<8x1xf32>
    %38 = vector.broadcast %37 : vector<8x1xf32> to vector<8x8xf32>
    %39 = arith.subf %13, %38 : vector<8x8xf32>
    %40 = math.exp %39 : vector<8x8xf32>
    %41 = vector.extract_strided_slice %34 {offsets = [0, 1], sizes = [8, 1], strides = [1, 1]} : vector<8x4xf32> to vector<8x1xf32>
    %42 = vector.broadcast %41 : vector<8x1xf32> to vector<8x8xf32>
    %43 = arith.subf %16, %42 : vector<8x8xf32>
    %44 = math.exp %43 : vector<8x8xf32>
    %45 = vector.extract_strided_slice %34 {offsets = [0, 2], sizes = [8, 1], strides = [1, 1]} : vector<8x4xf32> to vector<8x1xf32>
    %46 = vector.broadcast %45 : vector<8x1xf32> to vector<8x8xf32>
    %47 = arith.subf %19, %46 : vector<8x8xf32>
    %48 = math.exp %47 : vector<8x8xf32>
    %49 = vector.extract_strided_slice %34 {offsets = [0, 3], sizes = [8, 1], strides = [1, 1]} : vector<8x4xf32> to vector<8x1xf32>
    %50 = vector.broadcast %49 : vector<8x1xf32> to vector<8x8xf32>
    %51 = arith.subf %22, %50 : vector<8x8xf32>
    %52 = math.exp %51 : vector<8x8xf32>
    %53 = arith.mulf %36, %24 : vector<8x4xf32>
    %cst_24 = arith.constant dense<0.000000e+00> : vector<8xf32>
    %54 = vector.multi_reduction <add>, %40, %cst_24 [1] : vector<8x8xf32> to vector<8xf32>
    %55 = vector.shape_cast %54 : vector<8xf32> to vector<8x1xf32>
    %cst_25 = arith.constant dense<0.000000e+00> : vector<8xf32>
    %56 = vector.multi_reduction <add>, %44, %cst_25 [1] : vector<8x8xf32> to vector<8xf32>
    %57 = vector.shape_cast %56 : vector<8xf32> to vector<8x1xf32>
    %cst_26 = arith.constant dense<0.000000e+00> : vector<8xf32>
    %58 = vector.multi_reduction <add>, %48, %cst_26 [1] : vector<8x8xf32> to vector<8xf32>
    %59 = vector.shape_cast %58 : vector<8xf32> to vector<8x1xf32>
    %cst_27 = arith.constant dense<0.000000e+00> : vector<8xf32>
    %60 = vector.multi_reduction <add>, %52, %cst_27 [1] : vector<8x8xf32> to vector<8xf32>
    %61 = vector.shape_cast %60 : vector<8xf32> to vector<8x1xf32>
    %62 = tpu.concatenate %55, %57, %59, %61 in 1 : vector<8x1xf32>, vector<8x1xf32>, vector<8x1xf32>, vector<8x1xf32> -> vector<8x4xf32>
    %63 = arith.addf %53, %62 : vector<8x4xf32>
    %c0_28 = arith.constant 0 : index
    %c0_29 = arith.constant 0 : index
    %64 = vector.load %arg8[%c0_28, %c0_29] : memref<8x4xf32, #tpu.memory_space<vmem>>, vector<8x4xf32>
    tpu.vector_store %arg8[%c0_28, %c0_29], %63 {strides = array<i32>} : memref<8x4xf32, #tpu.memory_space<vmem>>, vector<8x4xf32>,
    %c0_30 = arith.constant 0 : index
    %c0_31 = arith.constant 0 : index
    %65 = vector.load %arg7[%c0_30, %c0_31] : memref<8x4xf32, #tpu.memory_space<vmem>>, vector<8x4xf32>
    tpu.vector_store %arg7[%c0_30, %c0_31], %34 {strides = array<i32>} : memref<8x4xf32, #tpu.memory_space<vmem>>, vector<8x4xf32>,
    %66 = vector.extract_strided_slice %10 {offsets = [0, 0], sizes = [8, 8], strides = [1, 1]} : vector<8x32xf32> to vector<8x8xf32>
    %cst_32 = arith.constant dense<0.000000e+00> : vector<8x8xf32>
    %67 = tpu.matmul %40, %66, %cst_32 {dimension_numbers = #tpu.dot_dimension_numbers<[1], [0], [0], [1], [0, 0, 1, 1], [], []>} : vector<8x8xf32>, vector<8x8xf32>, vector<8x8xf32> -> vector<8x8xf32>
    %68 = vector.extract_strided_slice %10 {offsets = [0, 8], sizes = [8, 8], strides = [1, 1]} : vector<8x32xf32> to vector<8x8xf32>
    %cst_33 = arith.constant dense<0.000000e+00> : vector<8x8xf32>
    %69 = tpu.matmul %44, %68, %cst_33 {dimension_numbers = #tpu.dot_dimension_numbers<[1], [0], [0], [1], [0, 0, 1, 1], [], []>} : vector<8x8xf32>, vector<8x8xf32>, vector<8x8xf32> -> vector<8x8xf32>
    %70 = vector.extract_strided_slice %10 {offsets = [0, 16], sizes = [8, 8], strides = [1, 1]} : vector<8x32xf32> to vector<8x8xf32>
    %cst_34 = arith.constant dense<0.000000e+00> : vector<8x8xf32>
    %71 = tpu.matmul %48, %70, %cst_34 {dimension_numbers = #tpu.dot_dimension_numbers<[1], [0], [0], [1], [0, 0, 1, 1], [], []>} : vector<8x8xf32>, vector<8x8xf32>, vector<8x8xf32> -> vector<8x8xf32>
    %72 = vector.extract_strided_slice %10 {offsets = [0, 24], sizes = [8, 8], strides = [1, 1]} : vector<8x32xf32> to vector<8x8xf32>
    %cst_35 = arith.constant dense<0.000000e+00> : vector<8x8xf32>
    %73 = tpu.matmul %52, %72, %cst_35 {dimension_numbers = #tpu.dot_dimension_numbers<[1], [0], [0], [1], [0, 0, 1, 1], [], []>} : vector<8x8xf32>, vector<8x8xf32>, vector<8x8xf32> -> vector<8x8xf32>
    %c0_36 = arith.constant 0 : index
    %c0_37 = arith.constant 0 : index
    %74 = vector.load %arg9[%c0_36, %c0_37] : memref<8x32xf32, #tpu.memory_space<vmem>>, vector<8x32xf32>
    %75 = vector.extract_strided_slice %36 {offsets = [0, 0], sizes = [8, 1], strides = [1, 1]} : vector<8x4xf32> to vector<8x1xf32>
    %76 = vector.extract_strided_slice %74 {offsets = [0, 0], sizes = [8, 8], strides = [1, 1]} : vector<8x32xf32> to vector<8x8xf32>
    %77 = vector.broadcast %75 : vector<8x1xf32> to vector<8x8xf32>
    %78 = arith.mulf %77, %76 : vector<8x8xf32>
    %79 = arith.addf %78, %67 : vector<8x8xf32>
    %80 = vector.extract_strided_slice %36 {offsets = [0, 1], sizes = [8, 1], strides = [1, 1]} : vector<8x4xf32> to vector<8x1xf32>
    %81 = vector.extract_strided_slice %74 {offsets = [0, 8], sizes = [8, 8], strides = [1, 1]} : vector<8x32xf32> to vector<8x8xf32>
    %82 = vector.broadcast %80 : vector<8x1xf32> to vector<8x8xf32>
    %83 = arith.mulf %82, %81 : vector<8x8xf32>
    %84 = arith.addf %83, %69 : vector<8x8xf32>
    %85 = vector.extract_strided_slice %36 {offsets = [0, 2], sizes = [8, 1], strides = [1, 1]} : vector<8x4xf32> to vector<8x1xf32>
    %86 = vector.extract_strided_slice %74 {offsets = [0, 16], sizes = [8, 8], strides = [1, 1]} : vector<8x32xf32> to vector<8x8xf32>
    %87 = vector.broadcast %85 : vector<8x1xf32> to vector<8x8xf32>
    %88 = arith.mulf %87, %86 : vector<8x8xf32>
    %89 = arith.addf %88, %71 : vector<8x8xf32>
    %90 = vector.extract_strided_slice %36 {offsets = [0, 3], sizes = [8, 1], strides = [1, 1]} : vector<8x4xf32> to vector<8x1xf32>
    %91 = vector.extract_strided_slice %74 {offsets = [0, 24], sizes = [8, 8], strides = [1, 1]} : vector<8x32xf32> to vector<8x8xf32>
    %92 = vector.broadcast %90 : vector<8x1xf32> to vector<8x8xf32>
    %93 = arith.mulf %92, %91 : vector<8x8xf32>
    %94 = arith.addf %93, %73 : vector<8x8xf32>
    %95 = tpu.concatenate %79, %84, %89, %94 in 1 : vector<8x8xf32>, vector<8x8xf32>, vector<8x8xf32>, vector<8x8xf32> -> vector<8x32xf32>
    %c0_38 = arith.constant 0 : index
    %c0_39 = arith.constant 0 : index
    %96 = vector.load %arg9[%c0_38, %c0_39] : memref<8x32xf32, #tpu.memory_space<vmem>>, vector<8x32xf32>
    tpu.vector_store %arg9[%c0_38, %c0_39], %95 {strides = array<i32>} : memref<8x32xf32, #tpu.memory_space<vmem>>, vector<8x32xf32>,
    %c0_i32_40 = arith.constant 0 : i32
    %97 = arith.cmpi eq, %arg2, %c0_i32_40 : i32
    %98 = arith.extui %97 : i1 to i32
    %c0_i32_41 = arith.constant 0 : i32
    %99 = arith.cmpi ne, %98, %c0_i32_41 : i32
    scf.if %99 {
      %c0_42 = arith.constant 0 : index
      %c0_43 = arith.constant 0 : index
      %100 = vector.load %arg8[%c0_42, %c0_43] : memref<8x4xf32, #tpu.memory_space<vmem>>, vector<8x4xf32>
      %101 = tpu.reciprocal %100 {approx = true} : vector<8x4xf32> -> vector<8x4xf32>
      %102 = arith.mulf %100, %101 : vector<8x4xf32>
      %cst_44 = arith.constant 2.000000e+00 : f32
      %103 = vector.broadcast %cst_44 : f32 to vector<8x4xf32>
      %104 = arith.subf %103, %102 : vector<8x4xf32>
      %105 = arith.mulf %101, %104 : vector<8x4xf32>
      %c0_45 = arith.constant 0 : index
      %c0_46 = arith.constant 0 : index
      %106 = vector.load %arg9[%c0_45, %c0_46] : memref<8x32xf32, #tpu.memory_space<vmem>>, vector<8x32xf32>
      %107 = vector.extract_strided_slice %106 {offsets = [0, 0], sizes = [8, 8], strides = [1, 1]} : vector<8x32xf32> to vector<8x8xf32>
      %108 = vector.extract_strided_slice %105 {offsets = [0, 0], sizes = [8, 1], strides = [1, 1]} : vector<8x4xf32> to vector<8x1xf32>
      %109 = vector.broadcast %108 : vector<8x1xf32> to vector<8x8xf32>
      %110 = arith.mulf %107, %109 : vector<8x8xf32>
      %111 = vector.extract_strided_slice %106 {offsets = [0, 8], sizes = [8, 8], strides = [1, 1]} : vector<8x32xf32> to vector<8x8xf32>
      %112 = vector.extract_strided_slice %105 {offsets = [0, 1], sizes = [8, 1], strides = [1, 1]} : vector<8x4xf32> to vector<8x1xf32>
      %113 = vector.broadcast %112 : vector<8x1xf32> to vector<8x8xf32>
      %114 = arith.mulf %111, %113 : vector<8x8xf32>
      %115 = vector.extract_strided_slice %106 {offsets = [0, 16], sizes = [8, 8], strides = [1, 1]} : vector<8x32xf32> to vector<8x8xf32>
      %116 = vector.extract_strided_slice %105 {offsets = [0, 2], sizes = [8, 1], strides = [1, 1]} : vector<8x4xf32> to vector<8x1xf32>
      %117 = vector.broadcast %116 : vector<8x1xf32> to vector<8x8xf32>
      %118 = arith.mulf %115, %117 : vector<8x8xf32>
      %119 = vector.extract_strided_slice %106 {offsets = [0, 24], sizes = [8, 8], strides = [1, 1]} : vector<8x32xf32> to vector<8x8xf32>
      %120 = vector.extract_strided_slice %105 {offsets = [0, 3], sizes = [8, 1], strides = [1, 1]} : vector<8x4xf32> to vector<8x1xf32>
      %121 = vector.broadcast %120 : vector<8x1xf32> to vector<8x8xf32>
      %122 = arith.mulf %119, %121 : vector<8x8xf32>
      %123 = tpu.concatenate %110, %114, %118, %122 in 1 : vector<8x8xf32>, vector<8x8xf32>, vector<8x8xf32>, vector<8x8xf32> -> vector<8x32xf32>
      %c0_47 = arith.constant 0 : index
      %c0_48 = arith.constant 0 : index
      %c0_49 = arith.constant 0 : index
      %124 = vector.load %arg6[%c0_47, %c0_48, %c0_49] : memref<1x8x32xf32, #tpu.memory_space<vmem>>, vector<1x8x32xf32>
      %125 = vector.shape_cast %124 : vector<1x8x32xf32> to vector<8x32xf32>
      %126 = vector.shape_cast %123 : vector<8x32xf32> to vector<1x8x32xf32>
      tpu.vector_store %arg6[%c0_47, %c0_48, %c0_49], %126 {strides = array<i32>} : memref<1x8x32xf32, #tpu.memory_space<vmem>>, vector<1x8x32xf32>,
    } else {
    }
    return
  }
  func.func @transform_0(%arg0: i32, %arg1: i32, %arg2: i32) -> (i32, i32, i32, i32) {
    %c0_i32 = arith.constant 0 : i32
    %c0_i32_0 = arith.constant 0 : i32
    %c0_i32_1 = arith.constant 0 : i32
    return %c0_i32, %arg0, %arg1, %c0_i32_0 : i32, i32, i32, i32
  }
  func.func @transform_1(%arg0: i32, %arg1: i32, %arg2: i32) -> (i32, i32, i32, i32) {
    %c1_i32 = arith.constant 1 : i32
    %c0_i32 = arith.constant 0 : i32
    %c0_i32_0 = arith.constant 0 : i32
    return %c1_i32, %arg0, %arg2, %c0_i32 : i32, i32, i32, i32
  }
  func.func @transform_2(%arg0: i32, %arg1: i32, %arg2: i32) -> (i32, i32, i32, i32) {
    %c2_i32 = arith.constant 2 : i32
    %c0_i32 = arith.constant 0 : i32
    %c0_i32_0 = arith.constant 0 : i32
    return %c2_i32, %arg0, %arg2, %c0_i32 : i32, i32, i32, i32
  }
  func.func @transform_3(%arg0: i32, %arg1: i32, %arg2: i32) -> (i32, i32, i32) {
    %c0_i32 = arith.constant 0 : i32
    %c0_i32_0 = arith.constant 0 : i32
    return %arg0, %arg1, %c0_i32 : i32, i32, i32
  }
}

module attributes {stable_mosaic.version = 11 : i64} {
  func.func @_linear_kernel(%arg0: i32, %arg1: i32, %arg2: i32, %arg3: i32, %arg4: memref<16x32xf32, #tpu.memory_space<vmem>>, %arg5: memref<1x32x32xf32, #tpu.memory_space<vmem>>, %arg6: memref<1x1x32xf32, #tpu.memory_space<vmem>>, %arg7: memref<1x16x32xf32, #tpu.memory_space<vmem>>, %arg8: memref<16x32xf32, #tpu.memory_space<vmem>>) attributes {dimension_semantics = [#tpu.dimension_semantics<parallel>, #tpu.dimension_semantics<parallel>, #tpu.dimension_semantics<parallel>, #tpu.dimension_semantics<arbitrary>], iteration_bounds = array<i64: 1, 1, 1, 1>, scalar_prefetch = 0 : i64, scratch_operands = 1 : i64, tpu.core_type = #tpu.core_type<tc>, window_params = [{transform_indices = @transform_0, window_bounds = array<i64: 16, 32>}, {transform_indices = @transform_1, window_bounds = array<i64: 1, 32, 32>}, {transform_indices = @transform_2, window_bounds = array<i64: 1, 1, 32>}, {transform_indices = @transform_3, window_bounds = array<i64: 1, 16, 32>}]} {
    %c0_i32 = arith.constant 0 : i32
    %0 = arith.cmpi eq, %arg3, %c0_i32 : i32
    %1 = arith.extui %0 : i1 to i32
    %c0_i32_0 = arith.constant 0 : i32
    %2 = arith.cmpi ne, %1, %c0_i32_0 : i32
    scf.if %2 {
      %cst_11 = arith.constant 0.000000e+00 : f32
      %13 = vector.broadcast %cst_11 : f32 to vector<16x32xf32>
      %c0_12 = arith.constant 0 : index
      %c0_13 = arith.constant 0 : index
      %14 = vector.load %arg8[%c0_12, %c0_13] : memref<16x32xf32, #tpu.memory_space<vmem>>, vector<16x32xf32>
      tpu.vector_store %arg8[%c0_12, %c0_13], %13 {strides = array<i32>} : memref<16x32xf32, #tpu.memory_space<vmem>>, vector<16x32xf32>,
    } else {
    }
    %c0 = arith.constant 0 : index
    %c0_1 = arith.constant 0 : index
    %3 = vector.load %arg8[%c0, %c0_1] : memref<16x32xf32, #tpu.memory_space<vmem>>, vector<16x32xf32>
    %c0_2 = arith.constant 0 : index
    %c0_3 = arith.constant 0 : index
    %4 = vector.load %arg4[%c0_2, %c0_3] : memref<16x32xf32, #tpu.memory_space<vmem>>, vector<16x32xf32>
    %c0_4 = arith.constant 0 : index
    %c0_5 = arith.constant 0 : index
    %c0_6 = arith.constant 0 : index
    %5 = vector.load %arg5[%c0_4, %c0_5, %c0_6] : memref<1x32x32xf32, #tpu.memory_space<vmem>>, vector<1x32x32xf32>
    %6 = vector.shape_cast %5 : vector<1x32x32xf32> to vector<32x32xf32>
    %cst = arith.constant dense<0.000000e+00> : vector<16x32xf32>
    %7 = tpu.matmul %4, %6, %cst {dimension_numbers = #tpu.dot_dimension_numbers<[1], [0], [0], [1], [0, 0, 1, 1], [], []>} : vector<16x32xf32>, vector<32x32xf32>, vector<16x32xf32> -> vector<16x32xf32>
    %8 = arith.addf %3, %7 : vector<16x32xf32>
    %c0_7 = arith.constant 0 : index
    %c0_8 = arith.constant 0 : index
    %9 = vector.load %arg8[%c0_7, %c0_8] : memref<16x32xf32, #tpu.memory_space<vmem>>, vector<16x32xf32>
    tpu.vector_store %arg8[%c0_7, %c0_8], %8 {strides = array<i32>} : memref<16x32xf32, #tpu.memory_space<vmem>>, vector<16x32xf32>,
    %c0_i32_9 = arith.constant 0 : i32
    %10 = arith.cmpi eq, %arg3, %c0_i32_9 : i32
    %11 = arith.extui %10 : i1 to i32
    %c0_i32_10 = arith.constant 0 : i32
    %12 = arith.cmpi ne, %11, %c0_i32_10 : i32
    scf.if %12 {
      %c0_11 = arith.constant 0 : index
      %c0_12 = arith.constant 0 : index
      %13 = vector.load %arg8[%c0_11, %c0_12] : memref<16x32xf32, #tpu.memory_space<vmem>>, vector<16x32xf32>
      %c0_13 = arith.constant 0 : index
      %c0_14 = arith.constant 0 : index
      %c0_15 = arith.constant 0 : index
      %14 = vector.load %arg6[%c0_13, %c0_14, %c0_15] : memref<1x1x32xf32, #tpu.memory_space<vmem>>, vector<1x1x32xf32>
      %15 = vector.shape_cast %14 : vector<1x1x32xf32> to vector<1x32xf32>
      %16 = vector.broadcast %15 : vector<1x32xf32> to vector<16x32xf32>
      %17 = arith.addf %13, %16 : vector<16x32xf32>
      %c0_16 = arith.constant 0 : index
      %c0_17 = arith.constant 0 : index
      %c0_18 = arith.constant 0 : index
      %18 = vector.load %arg7[%c0_16, %c0_17, %c0_18] : memref<1x16x32xf32, #tpu.memory_space<vmem>>, vector<1x16x32xf32>
      %19 = vector.shape_cast %18 : vector<1x16x32xf32> to vector<16x32xf32>
      %20 = vector.shape_cast %17 : vector<16x32xf32> to vector<1x16x32xf32>
      tpu.vector_store %arg7[%c0_16, %c0_17, %c0_18], %20 {strides = array<i32>} : memref<1x16x32xf32, #tpu.memory_space<vmem>>, vector<1x16x32xf32>,
    } else {
    }
    return
  }
  func.func @transform_0(%arg0: i32, %arg1: i32, %arg2: i32, %arg3: i32) -> (i32, i32) {
    %c0_i32 = arith.constant 0 : i32
    return %arg1, %arg3 : i32, i32
  }
  func.func @transform_1(%arg0: i32, %arg1: i32, %arg2: i32, %arg3: i32) -> (i32, i32, i32) {
    %c0_i32 = arith.constant 0 : i32
    return %arg0, %arg3, %arg2 : i32, i32, i32
  }
  func.func @transform_2(%arg0: i32, %arg1: i32, %arg2: i32, %arg3: i32) -> (i32, i32, i32) {
    %c0_i32 = arith.constant 0 : i32
    %c0_i32_0 = arith.constant 0 : i32
    return %arg0, %c0_i32, %arg2 : i32, i32, i32
  }
  func.func @transform_3(%arg0: i32, %arg1: i32, %arg2: i32, %arg3: i32) -> (i32, i32, i32) {
    %c0_i32 = arith.constant 0 : i32
    return %arg0, %arg1, %arg2 : i32, i32, i32
  }
}

</mosaic_0001>

<llo_original>
// kernel: multi_head_attention.3
$region0: #{multi_head_attention.3}
  #allocation0 [shape = 'u32[]', space=smem, size = 0x4, offset = 0x4, fixed_abs, tag = 'smem constant byte address 0x4 - core index']
  #allocation1 [shape = 'u32[144,128]{1,0:T(1,128)}', space=vmem, size = 0x12000, scoped, tag = 'internal scratch']
  #allocation2 [shape = 'f32[16,32]{1,0:T(8,128)}', space=vmem, size = 0x2000, scoped, tag = 'scratch operand']
  %s0 = inlined_call_operand.hbm [shape: f32[16,32], index: 0, kind: input, shape index: {}]
  %s1 = inlined_call_operand.hbm [shape: f32[3,32,32], index: 1, kind: input, shape index: {}]
  %s2 = inlined_call_operand.vmem [shape: f32[3,1,32], index: 2, kind: input, shape index: {}]
  %s3 = inlined_call_operand.vmem [shape: f32[3,16,32], index: 3, kind: output, shape index: {}]
  %s4 = sld [smem:[#allocation0]]
  $region61: #{multi_head_attention.3} parent=0
    _
  %s6 = ssub.s32 1, %s4
  %s7 = scalar_select 0, %s6, %s4
  $region1: #{multi_head_attention.3} parent=0
    #allocation3 [shape = 'u8[8192]{0}', space=vmem, size = 0x2000, scoped, tag = 'input window, operand 0, single buffered']
    #allocation4 [shape = 's32[2]{0}', space=sflag, size = 0x8, scoped, tag = 'scoped memory for multi_head_attention.3']
    #allocation5 [shape = 'u8[32768]{0}', space=vmem, size = 0x8000, scoped, tag = 'input window, operand 1']
    #allocation6 [shape = 's32[2]{0}', space=sflag, size = 0x8, scoped, tag = 'scoped memory for multi_head_attention.3']
    %8 = vsyncpa [#allocation4], 0
    %9 = vsyncpa [#allocation6], 0
    %s10 = scalar_lea.sflag [#allocation6], 1
    %11 = vsyncpa %s10, 0
    loop: start=0, step=1, limit=5
    $region2: #{multi_head_attention.3} parent=1 // loop_pre_header
      _
    $region3: #{multi_head_attention.3} parent=1 // loop_header
      %s13 = sphi 0, %s17
      %p14 = scmp.ge.s32.totalorder %s13, 5
      %s20 = sphi 0, %s46
      %s21 = sphi 0, %s42
      %s22 = sphi 0, %s38
      %s23 = sphi 0, %s34
      %s24 = sphi 0, %s20
      %s25 = sphi 0, %s21
      %s26 = sphi 0, %s22
      %s27 = sphi 0, %s23
      %s28 = sphi 0, %s24
      %s29 = sphi 0, %s25
      %s30 = sphi 0, %s26
      %s31 = sphi 0, %s27
      %s51 = sphi 0, %s53
      %s54 = sphi 0, %s51
      %s55 = sphi 0, %s54
      %s71 = sphi 0, %s55
      %s81 = sphi 0, %s83
      %s84 = sphi 0, %s81
      %s85 = sphi 0, %s84
      %s101 = sphi 0, %s85
      %s109 = sphi 0, %s111
      %s112 = sphi 0, %s109
      %s113 = sphi 0, %s112
      %s129 = sphi 0, %s113
      %s139 = sphi 0, %s141
      %s142 = sphi 0, %s139
      %s143 = sphi 0, %s142
      %s159 = sphi 0, %s143
    $region4: #{multi_head_attention.3} parent=1 // loop_header_branch
      %16 = sbr.rel (%p14) target = $region8
    $region5: #{multi_head_attention.3} parent=1 // loop_body
      %s18 = ssub.s32 %s13, 1
      %s19 = ssub.s32 %s13, 2
      %s32 = sadd.s32 1, %s23
      %p33 = scmp.ge.s32.totalorder %s32, 1
      %s34 = scalar_select %p33, 0, %s32
      %s35 = sadd.s32 1, %s22
      %s36 = scalar_select %p33, %s35, %s22
      %p37 = scmp.ge.s32.totalorder %s36, 1
      %s38 = scalar_select %p37, 0, %s36
      %s39 = sadd.s32 1, %s21
      %s40 = scalar_select %p37, %s39, %s21
      %p41 = scmp.ge.s32.totalorder %s40, 1
      %s42 = scalar_select %p41, 0, %s40
      %s43 = sadd.s32 1, %s20
      %s44 = scalar_select %p41, %s43, %s20
      %p45 = scmp.ge.s32.totalorder %s44, 3
      %s46 = scalar_select %p45, 0, %s44
      %s47 = ssub.s32 %s21, %s42
      %s48 = ssub.s32 %s23, %s34
      %s49 = sor.u32 %s47, %s48
      %p50 = scmp.eq.s32.totalorder %s49, 0
      %s52 = sadd.s32 %s51, 1
      %s53 = scalar_select %p50, %s51, %s52
      %p56 = pneg %p50
      %p57 = scmp.eq.s32.totalorder %s13, 2
      %p58 = por %p56, %p57
      %p59 = scmp.ne.s32.totalorder %s51, %s54
      %p60 = scmp.eq.s32.totalorder %s13, 0
      %p61 = por %p59, %p60
      %p62 = scmp.ne.s32.totalorder %s51, %s54
      %p63 = scmp.eq.s32.totalorder %s18, 2
      %p64 = por %p62, %p63
      %p65 = scmp.ne.s32.totalorder %s54, %s55
      %p66 = scmp.eq.s32.totalorder %s18, 0
      %p67 = por %p65, %p66
      %p68 = scmp.ne.s32.totalorder %s54, %s55
      %p69 = scmp.eq.s32.totalorder %s19, 2
      %p70 = por %p68, %p69
      %p72 = scmp.ne.s32.totalorder %s55, %s71
      %p73 = scmp.eq.s32.totalorder %s19, 0
      %p74 = por %p72, %p73
      %s75 = ssub.s32 %s20, %s46
      %s76 = ssub.s32 %s23, %s34
      %s77 = sor.u32 %s75, %s76
      %s78 = ssub.s32 %s22, %s38
      %s79 = sor.u32 %s77, %s78
      %p80 = scmp.eq.s32.totalorder %s79, 0
      %s82 = sadd.s32 %s81, 1
      %s83 = scalar_select %p80, %s81, %s82
      %p86 = pneg %p80
      %p87 = scmp.eq.s32.totalorder %s13, 2
      %p88 = por %p86, %p87
      %p89 = scmp.ne.s32.totalorder %s81, %s84
      %p90 = scmp.eq.s32.totalorder %s13, 0
      %p91 = por %p89, %p90
      %p92 = scmp.ne.s32.totalorder %s81, %s84
      %p93 = scmp.eq.s32.totalorder %s18, 2
      %p94 = por %p92, %p93
      %p95 = scmp.ne.s32.totalorder %s84, %s85
      %p96 = scmp.eq.s32.totalorder %s18, 0
      %p97 = por %p95, %p96
      %p98 = scmp.ne.s32.totalorder %s84, %s85
      %p99 = scmp.eq.s32.totalorder %s19, 2
      %p100 = por %p98, %p99
      %p102 = scmp.ne.s32.totalorder %s85, %s101
      %p103 = scmp.eq.s32.totalorder %s19, 0
      %p104 = por %p102, %p103
      %s105 = ssub.s32 %s20, %s46
      %s106 = ssub.s32 %s22, %s38
      %s107 = sor.u32 %s105, %s106
      %p108 = scmp.eq.s32.totalorder %s107, 0
      %s110 = sadd.s32 %s109, 1
      %s111 = scalar_select %p108, %s109, %s110
      %p114 = pneg %p108
      %p115 = scmp.eq.s32.totalorder %s13, 2
      %p116 = por %p114, %p115
      %p117 = scmp.ne.s32.totalorder %s109, %s112
      %p118 = scmp.eq.s32.totalorder %s13, 0
      %p119 = por %p117, %p118
      %p120 = scmp.ne.s32.totalorder %s109, %s112
      %p121 = scmp.eq.s32.totalorder %s18, 2
      %p122 = por %p120, %p121
      %p123 = scmp.ne.s32.totalorder %s112, %s113
      %p124 = scmp.eq.s32.totalorder %s18, 0
      %p125 = por %p123, %p124
      %p126 = scmp.ne.s32.totalorder %s112, %s113
      %p127 = scmp.eq.s32.totalorder %s19, 2
      %p128 = por %p126, %p127
      %p130 = scmp.ne.s32.totalorder %s113, %s129
      %p131 = scmp.eq.s32.totalorder %s19, 0
      %p132 = por %p130, %p131
      %s133 = ssub.s32 %s20, %s46
      %s134 = ssub.s32 %s21, %s42
      %s135 = sor.u32 %s133, %s134
      %s136 = ssub.s32 %s22, %s38
      %s137 = sor.u32 %s135, %s136
      %p138 = scmp.eq.s32.totalorder %s137, 0
      %s140 = sadd.s32 %s139, 1
      %s141 = scalar_select %p138, %s139, %s140
      %p144 = pneg %p138
      %p145 = scmp.eq.s32.totalorder %s13, 2
      %p146 = por %p144, %p145
      %p147 = scmp.ne.s32.totalorder %s139, %s142
      %p148 = scmp.eq.s32.totalorder %s13, 0
      %p149 = por %p147, %p148
      %p150 = scmp.ne.s32.totalorder %s139, %s142
      %p151 = scmp.eq.s32.totalorder %s18, 2
      %p152 = por %p150, %p151
      %p153 = scmp.ne.s32.totalorder %s142, %s143
      %p154 = scmp.eq.s32.totalorder %s18, 0
      %p155 = por %p153, %p154
      %p156 = scmp.ne.s32.totalorder %s142, %s143
      %p157 = scmp.eq.s32.totalorder %s19, 2
      %p158 = por %p156, %p157
      %p160 = scmp.ne.s32.totalorder %s143, %s159
      %p161 = scmp.eq.s32.totalorder %s19, 0
      %p162 = por %p160, %p161
      %p163 = scmp.le.s32.totalorder 1, %s13
      %p164 = scmp.lt.s32.totalorder %s13, 4
      %p165 = pnand %p163, %p164
      %p166 = pneg %p165
      // Predicated region
      $region9: #{multi_head_attention.3} parent=5 // pred_check
        _
      $region10: #{multi_head_attention.3} parent=5 // pred_check_branch
        %168 = sbr.rel (%p165) target = $region12
      $region11: #{multi_head_attention.3} parent=5 // pred_region
        %s169 = ssub.s32 %s13, 1
        // Predicated region
        $region13: #{multi_head_attention.3} parent=11 // pred_check
          %p170 = pneg %p67
        $region14: #{multi_head_attention.3} parent=11 // pred_check_branch
          %172 = sbr.rel (%p170) target = $region16
        $region15: #{multi_head_attention.3} parent=11 // pred_region
          %s173 = smul.u32 2, %s25
          %s175 = ssub.s32 256, 256
          %176 = vsyncadd [#allocation4], %s175
          %s177 = sadd.s32 %s27, %s173
          %s178 = smul.addr %s177, 128
          %s179 = scalar_lea.hbm %s0, %s178
          %s180 = sshll.u32 [#allocation3], 4
          %s181 = int_to_ptr.vmem [resolvable:$true] %s180
          %186 = dma.hbm_to_vmem [thread:$0]  %s179, 256, %s181, [#allocation4], 128, 128, 8
        $region16: #{multi_head_attention.3} parent=11 // pred_fallthru
          _
      $region12: #{multi_head_attention.3} parent=5 // pred_fallthru
        _
      %p187 = scmp.lt.s32.totalorder %s13, 3
      // Predicated region
      $region17: #{multi_head_attention.3} parent=5 // pred_check
        %p188 = pneg %p187
      $region18: #{multi_head_attention.3} parent=5 // pred_check_branch
        %190 = sbr.rel (%p188) target = $region20
      $region19: #{multi_head_attention.3} parent=5 // pred_region
        // Predicated region
        $region21: #{multi_head_attention.3} parent=19 // pred_check
          %p191 = pneg %p91
        $region22: #{multi_head_attention.3} parent=19 // pred_check_branch
          %193 = sbr.rel (%p191) target = $region24
        $region23: #{multi_head_attention.3} parent=19 // pred_region
          %s194 = sand.u32 %s81, 1
          %s195 = scalar_lea.sflag [#allocation6], %s194
          %s196 = sand.u32 %s81, 1
          %s197 = smul.addr %s196, 32
          %s198 = scalar_lea.vmem [#allocation5], %s197
          %s199 = smul.u32 4, %s23
          %s201 = ssub.s32 512, 512
          %202 = vsyncadd %s195, %s201
          %s203 = sadd.s32 %s22, %s199
          %s204 = smul.addr %s20, 4
          %s205 = sadd.s32 %s203, %s204
          %s206 = smul.addr %s205, 128
          %s207 = scalar_lea.hbm %s1, %s206
          %s208 = sshll.u32 %s198, 4
          %s209 = int_to_ptr.vmem [resolvable:$true] %s208
          %214 = dma.hbm_to_vmem [thread:$0]  %s207, 512, %s209, %s195, 128, 128, 8
        $region24: #{multi_head_attention.3} parent=19 // pred_fallthru
          _
        // Predicated region
        $region25: #{multi_head_attention.3} parent=19 // pred_check
          %p215 = pneg %p119
        $region26: #{multi_head_attention.3} parent=19 // pred_check_branch
          %217 = sbr.rel (%p215) target = $region28
        $region27: #{multi_head_attention.3} parent=19 // pred_region
          %p218 = scmp.lt.s32.totalorder %s20, 2
          %s219 = scalar_select %p218, %s20, 2
          %p220 = scmp.lt.s32.totalorder %s22, 0
          %s221 = scalar_select %p220, %s22, 0
          %s222 = sadd.s32 %s221, %s219
          %s223 = scalar_lea.vmem %s2, %s222
        $region28: #{multi_head_attention.3} parent=19 // pred_fallthru
          _
      $region20: #{multi_head_attention.3} parent=5 // pred_fallthru
        _
      %p224 = scmp.le.s32.totalorder 1, %s13
      %p225 = scmp.lt.s32.totalorder %s13, 4
      %p226 = pnand %p224, %p225
      %p227 = pneg %p226
      // Predicated region
      $region29: #{multi_head_attention.3} parent=5 // pred_check
        _
      $region30: #{multi_head_attention.3} parent=5 // pred_check_branch
        %229 = sbr.rel (%p226) target = $region32
      $region31: #{multi_head_attention.3} parent=5 // pred_region
        %s230 = ssub.s32 %s13, 1
        // Predicated region
        $region33: #{multi_head_attention.3} parent=31 // pred_check
          %p231 = pneg %p67
        $region34: #{multi_head_attention.3} parent=31 // pred_check_branch
          %233 = sbr.rel (%p231) target = $region36
        $region35: #{multi_head_attention.3} parent=31 // pred_region
          %234 = dma.done [#allocation4], 256
        $region36: #{multi_head_attention.3} parent=31 // pred_fallthru
          _
        %s235 = sand.u32 %s84, 1
        %s236 = scalar_lea.sflag [#allocation6], %s235
        %s237 = sand.u32 %s84, 1
        %s238 = smul.addr %s237, 32
        %s239 = scalar_lea.vmem [#allocation5], %s238
        // Predicated region
        $region37: #{multi_head_attention.3} parent=31 // pred_check
          %p240 = pneg %p97
        $region38: #{multi_head_attention.3} parent=31 // pred_check_branch
          %242 = sbr.rel (%p240) target = $region40
        $region39: #{multi_head_attention.3} parent=31 // pred_region
          %243 = dma.done %s236, 512
        $region40: #{multi_head_attention.3} parent=31 // pred_fallthru
          _
        %p244 = pneg %p67
        %p245 = pneg %p64
        %s246 = sand.u32 %s84, 1
        %s247 = scalar_lea.sflag [#allocation6], %s246
        %s248 = sand.u32 %s84, 1
        %s249 = smul.addr %s248, 32
        %s250 = scalar_lea.vmem [#allocation5], %s249
        %p251 = pneg %p97
        %p252 = pneg %p94
        %p253 = scmp.lt.s32.totalorder %s24, 2
        %s254 = scalar_select %p253, %s24, 2
        %p255 = scmp.lt.s32.totalorder %s26, 0
        %s256 = scalar_select %p255, %s26, 0
        %s257 = sadd.s32 %s256, %s254
        %s258 = scalar_lea.vmem %s2, %s257
        %p259 = pneg %p125
        %p260 = pneg %p122
        %p261 = pneg %p155
        %p262 = pneg %p152
        %s263 = smul.u32 2, %s25
        %p264 = scmp.lt.s32.totalorder %s24, 2
        %s265 = scalar_select %p264, %s24, 2
        %p266 = scmp.lt.s32.totalorder %s263, 1
        %s267 = scalar_select %p266, %s263, 1
        %p268 = scmp.lt.s32.totalorder %s26, 0
        %s269 = scalar_select %p268, %s26, 0
        %s270 = sadd.s32 %s269, %s267
        %s271 = smul.addr %s265, 2
        %s272 = sadd.s32 %s270, %s271
        %s273 = smul.addr %s272, 8
        %s274 = scalar_lea.vmem %s3, %s273
        %s275 = smul.u32 2, %s25
        %s276 = smul.u32 4, %s27
        %p277 = scmp.lt.s32.totalorder %s24, 2
        %s278 = scalar_select %p277, %s24, 2
        %p279 = scmp.lt.s32.totalorder %s26, 0
        %s280 = scalar_select %p279, %s26, 0
        %s281 = sadd.s32 %s280, %s278
        %s282 = scalar_lea.vmem %s2, %s281
        %s283 = smul.u32 2, %s25
        %p284 = scmp.lt.s32.totalorder %s24, 2
        %s285 = scalar_select %p284, %s24, 2
        %p286 = scmp.lt.s32.totalorder %s283, 1
        %s287 = scalar_select %p286, %s283, 1
        %p288 = scmp.lt.s32.totalorder %s26, 0
        %s289 = scalar_select %p288, %s26, 0
        %s290 = sadd.s32 %s289, %s287
        %s291 = smul.addr %s285, 2
        %s292 = sadd.s32 %s290, %s291
        %s293 = smul.addr %s292, 8
        %s294 = scalar_lea.vmem %s3, %s293
        %s295 = smul.u32 2, %s25
        %p296 = scmp.eq.s32.totalorder %s27, 0
        // Predicated region
        $region41: #{multi_head_attention.3} parent=31 // pred_check
          %p297 = pneg %p296
        $region42: #{multi_head_attention.3} parent=31 // pred_check_branch
          %299 = sbr.rel (%p297) target = $region44
        $region43: #{multi_head_attention.3} parent=31 // pred_region
          %vm300 = vcmask 261120
          %301 = vst.msk [vmem:[#allocation2] sm:$0xff] %vm300, 0.0
          %302 = vst.msk [vmem:[#allocation2 + $0x8] sm:$0xff] %vm300, 0.0
        $region44: #{multi_head_attention.3} parent=31 // pred_fallthru
          _
        %v303 = vld [vmem:[#allocation2] sm:$0xff]
        %v304 = vld [vmem:[#allocation2 + $0x8] sm:$0xff]
        %v305 = vld [vmem:[#allocation3] sm:$0xff]
        %v306 = vld [vmem:[#allocation3 + $0x8] sm:$0xff]
        %v307 = vld [vmem:[%s239] sm:$0xff]
        %v308 = vld [vmem:[%s239 + $0x8] sm:$0xff]
        %v309 = vld [vmem:[%s239 + $0x10] sm:$0xff]
        %v310 = vld [vmem:[%s239 + $0x18] sm:$0xff]
        %vm311 = vcmask 261120
        %v313 = vsel %vm311, %v305, 0
        %v316 = vsel %vm311, %v306, 0
        %318 = vmatprep.subr.mxu0 0.0
        %319 = vmatpush1.msra.mxu0 %v307
        %320 = vmatprep.subr.mxu0 0.0
        %321 = vmatpush1.msra.mxu0 %v308
        %322 = vmatprep.subr.mxu0 0.0
        %323 = vmatpush1.msra.mxu0 %v309
        %324 = vmatprep.subr.mxu0 0.0
        %325 = vmatpush1.msra.mxu0 %v310
        %326 = vmatprep.subr.mxu0 0.0
        %327 = vmatpush1.msra.mxu0 0.0
        %328 = vmatprep.subr.mxu0 0.0
        %329 = vmatpush1.msra.mxu0 0.0
        %330 = vmatprep.subr.mxu0 0.0
        %331 = vmatpush1.msra.mxu0 0.0
        %332 = vmatprep.subr.mxu0 0.0
        %333 = vmatpush1.msra.mxu0 0.0
        %334 = vmatprep.subr.mxu0 0.0
        %335 = vmatpush1.msra.mxu0 0.0
        %336 = vmatprep.subr.mxu0 0.0
        %337 = vmatpush1.msra.mxu0 0.0
        %338 = vmatprep.subr.mxu0 0.0
        %339 = vmatpush1.msra.mxu0 0.0
        %340 = vmatprep.subr.mxu0 0.0
        %341 = vmatpush1.msra.mxu0 0.0
        %342 = vmatprep.subr.mxu0 0.0
        %343 = vmatpush1.msra.mxu0 0.0
        %344 = vmatprep.subr.mxu0 0.0
        %345 = vmatpush1.msra.mxu0 0.0
        %346 = vmatprep.subr.mxu0 0.0
        %347 = vmatpush1.msra.mxu0 0.0
        %348 = vmatprep.subr.mxu0 0.0
        %349 = vmatpush1.msra.mxu0 0.0
        %350 = vmatprep.subr.mxu0 0.0
        %351 = vmatpush1.msra.mxu0 0.0
        %352 = vmatprep.subr.mxu0 0.0
        %353 = vmatpush1.msra.mxu0 0.0
        %354 = vmatprep.subr.mxu0 0.0
        %355 = vmatpush1.msra.mxu0 0.0
        %356 = vmatprep.subr.mxu0 0.0
        %357 = vmatpush1.msra.mxu0 0.0
        %358 = vmatprep.subr.mxu0 0.0
        %359 = vmatpush1.msra.mxu0 0.0
        %360 = vmatprep.subr.mxu0 0.0
        %361 = vmatpush1.msra.mxu0 0.0
        %362 = vmatprep.subr.mxu0 0.0
        %363 = vmatpush1.msra.mxu0 0.0
        %364 = vmatprep.subr.mxu0 0.0
        %365 = vmatpush1.msra.mxu0 0.0
        %366 = vmatprep.subr.mxu0 0.0
        %367 = vmatpush1.msra.mxu0 0.0
        %368 = vmatprep.subr.mxu0 0.0
        %369 = vmatpush1.msra.mxu0 0.0
        %370 = vmatprep.subr.mxu0 0.0
        %371 = vmatpush1.msra.mxu0 0.0
        %372 = vmatprep.subr.mxu0 0.0
        %373 = vmatpush1.msra.mxu0 0.0
        %374 = vmatprep.subr.mxu0 0.0
        %375 = vmatpush1.msra.mxu0 0.0
        %376 = vmatprep.subr.mxu0 0.0
        %377 = vmatpush1.msra.mxu0 0.0
        %378 = vmatprep.subr.mxu0 0.0
        %379 = vmatpush1.msra.mxu0 0.0
        %380 = vmatprep.subr.mxu0 0.0
        %381 = vmatpush1.msra.mxu0 0.0
        %382 = vmatprep.mubr.f32.mxu0 0.0
        %383 = vmatmul.mubr.f32.gmra.mrb[0].mxu0 %v313
        %v384 = vpop.f32.mrb[0].mxu0
        %v385 = vadd.f32 0.0, %v384
        %v386 = vpop.f32.mrb[0].mxu0
        %387 = vmatprep.mubr.f32.mxu0 0.0
        %388 = vmatmul.mubr.f32.gmra.mrb[0].mxu0 %v316
        %v389 = vpop.f32.mrb[0].mxu0
        %v390 = vadd.f32 0.0, %v389
        %v391 = vpop.f32.mrb[0].mxu0
        %392 = vdwg.mxu0
        %v393 = vadd.f32 %v303, %v385
        %v394 = vadd.f32 %v304, %v390
        %395 = vst.msk [vmem:[#allocation2] sm:$0xff] %vm311, %v393
        %396 = vst.msk [vmem:[#allocation2 + $0x8] sm:$0xff] %vm311, %v394
        // Predicated region
        $region45: #{multi_head_attention.3} parent=31 // pred_check
          %p397 = pneg %p296
        $region46: #{multi_head_attention.3} parent=31 // pred_check_branch
          %399 = sbr.rel (%p397) target = $region48
        $region47: #{multi_head_attention.3} parent=31 // pred_region
          %v400 = vld [vmem:[#allocation2] sm:$0xff]
          %v401 = vld [vmem:[#allocation2 + $0x8] sm:$0xff]
          %v402 = vld [vmem:[%s282] sm:$0x1]
          %v404 = vlaneseq
          %v405 = vshrl.u32 %v404, 7
          %v406 = vsub.s32 0, %v405
          %v407 = vrot.slane %v402, %v406
          %v409 = vadd.f32 %v400, %v407
          %v410 = vadd.f32 %v401, %v407
          %411 = vst.msk [vmem:[%s294] sm:$0xff] %vm311, %v409
          %412 = vst.msk [vmem:[%s294 + $0x8] sm:$0xff] %vm311, %v410
        $region48: #{multi_head_attention.3} parent=31 // pred_fallthru
          _
        %s413 = smul.u32 2, %s25
        %p414 = scmp.lt.s32.totalorder %s24, 2
        %s415 = scalar_select %p414, %s24, 2
        %p416 = scmp.lt.s32.totalorder %s413, 1
        %s417 = scalar_select %p416, %s413, 1
        %p418 = scmp.lt.s32.totalorder %s26, 0
        %s419 = scalar_select %p418, %s26, 0
        %s420 = sadd.s32 %s419, %s417
        %s421 = smul.addr %s415, 2
        %s422 = sadd.s32 %s420, %s421
        %s423 = smul.addr %s422, 8
        %s424 = scalar_lea.vmem %s3, %s423
        // Predicated region
        $region49: #{multi_head_attention.3} parent=31 // pred_check
          %p425 = pneg %p152
        $region50: #{multi_head_attention.3} parent=31 // pred_check_branch
          %427 = sbr.rel (%p425) target = $region52
        $region51: #{multi_head_attention.3} parent=31 // pred_region
          %s428 = smul.u32 2, %s25
        $region52: #{multi_head_attention.3} parent=31 // pred_fallthru
          _
      $region32: #{multi_head_attention.3} parent=5 // pred_fallthru
        _
      %p429 = scmp.le.s32.totalorder 2, %s13
      // Predicated region
      $region53: #{multi_head_attention.3} parent=5 // pred_check
        %p430 = pneg %p429
      $region54: #{multi_head_attention.3} parent=5 // pred_check_branch
        %432 = sbr.rel (%p430) target = $region56
      $region55: #{multi_head_attention.3} parent=5 // pred_region
        %s433 = ssub.s32 %s13, 2
        // Predicated region
        $region57: #{multi_head_attention.3} parent=55 // pred_check
          %p434 = pneg %p158
        $region58: #{multi_head_attention.3} parent=55 // pred_check_branch
          %436 = sbr.rel (%p434) target = $region60
        $region59: #{multi_head_attention.3} parent=55 // pred_region
          %s437 = smul.u32 2, %s29
          %p438 = scmp.lt.s32.totalorder %s28, 2
          %s439 = scalar_select %p438, %s28, 2
          %p440 = scmp.lt.s32.totalorder %s437, 1
          %s441 = scalar_select %p440, %s437, 1
          %p442 = scmp.lt.s32.totalorder %s30, 0
          %s443 = scalar_select %p442, %s30, 0
          %s444 = sadd.s32 %s443, %s441
          %s445 = smul.addr %s439, 2
          %s446 = sadd.s32 %s444, %s445
          %s447 = smul.addr %s446, 8
          %s448 = scalar_lea.vmem %s3, %s447
        $region60: #{multi_head_attention.3} parent=55 // pred_fallthru
          _
      $region56: #{multi_head_attention.3} parent=5 // pred_fallthru
        _
    $region6: #{multi_head_attention.3} parent=1 // loop_footer
      %s17 = sadd.s32 1, %s13
    $region7: #{multi_head_attention.3} parent=1 // loop_footer_branch
      %12 = sbr.rel target = $region3
    $region8: #{multi_head_attention.3} parent=1 // loop_exit
      _
    %449 = vsyncpa [#allocation4], 1
    %s450 = scalar_lea.sflag [#allocation4], 1
    %451 = vsyncpa %s450, 1
    %452 = vsyncpa [#allocation6], 1
    %s453 = scalar_lea.sflag [#allocation6], 1
    %454 = vsyncpa %s453, 1

// kernel: multi_head_attention.4
$region0: #{multi_head_attention.4}
  #allocation0 [shape = 'u32[]', space=smem, size = 0x4, offset = 0x4, fixed_abs, tag = 'smem constant byte address 0x4 - core index']
  #allocation1 [shape = 'u32[144,128]{1,0:T(1,128)}', space=vmem, size = 0x12000, scoped, tag = 'internal scratch']
  #allocation2 [shape = 'f32[8,4]{1,0:T(8,128)}', space=vmem, size = 0x1000, scoped, tag = 'scratch operand']
  #allocation3 [shape = 'f32[8,4]{1,0:T(8,128)}', space=vmem, size = 0x1000, scoped, tag = 'scratch operand']
  #allocation4 [shape = 'f32[8,32]{1,0:T(8,128)}', space=vmem, size = 0x1000, scoped, tag = 'scratch operand']
  %s0 = inlined_call_operand.vmem [shape: f32[3,2,8,32], index: 0, kind: input, shape index: {}, may-alias: {0,1,2}]
  %s1 = inlined_call_operand.vmem [shape: f32[3,2,8,32], index: 1, kind: input, shape index: {}, may-alias: {0,1,2}]
  %s2 = inlined_call_operand.vmem [shape: f32[3,2,8,32], index: 2, kind: input, shape index: {}, may-alias: {0,1,2}]
  %s3 = inlined_call_operand.vmem [shape: f32[2,8,32], index: 3, kind: output, shape index: {}]
  %s4 = sld [smem:[#allocation0]]
  $region53: #{multi_head_attention.4} parent=0
    _
  %s6 = ssub.s32 1, %s4
  %s7 = scalar_select 0, %s6, %s4
  loop: start=0, step=1, limit=4
  $region2: #{multi_head_attention.4} parent=0 // loop_pre_header
    _
  $region3: #{multi_head_attention.4} parent=0 // loop_header
    %s9 = sphi 0, %s13
    %p10 = scmp.ge.s32.totalorder %s9, 4
    %s16 = sphi 0, %s35
    %s17 = sphi 0, %s31
    %s18 = sphi 0, %s27
    %s19 = sphi 0, %s16
    %s20 = sphi 0, %s17
    %s21 = sphi 0, %s18
    %s22 = sphi 0, %s19
    %s23 = sphi 0, %s20
    %s24 = sphi 0, %s21
    %s40 = sphi 0, %s42
    %s43 = sphi 0, %s40
    %s44 = sphi 0, %s43
    %s60 = sphi 0, %s44
    %s68 = sphi 0, %s70
    %s71 = sphi 0, %s68
    %s72 = sphi 0, %s71
    %s88 = sphi 0, %s72
    %s96 = sphi 0, %s98
    %s99 = sphi 0, %s96
    %s100 = sphi 0, %s99
    %s116 = sphi 0, %s100
    %s124 = sphi 0, %s126
    %s127 = sphi 0, %s124
    %s128 = sphi 0, %s127
    %s144 = sphi 0, %s128
  $region4: #{multi_head_attention.4} parent=0 // loop_header_branch
    %12 = sbr.rel (%p10) target = $region8
  $region5: #{multi_head_attention.4} parent=0 // loop_body
    %s14 = ssub.s32 %s9, 1
    %s15 = ssub.s32 %s9, 2
    %s25 = sadd.s32 1, %s18
    %p26 = scmp.ge.s32.totalorder %s25, 1
    %s27 = scalar_select %p26, 0, %s25
    %s28 = sadd.s32 1, %s17
    %s29 = scalar_select %p26, %s28, %s17
    %p30 = scmp.ge.s32.totalorder %s29, 1
    %s31 = scalar_select %p30, 0, %s29
    %s32 = sadd.s32 1, %s16
    %s33 = scalar_select %p30, %s32, %s16
    %p34 = scmp.ge.s32.totalorder %s33, 2
    %s35 = scalar_select %p34, 0, %s33
    %s36 = ssub.s32 %s16, %s35
    %s37 = ssub.s32 %s17, %s31
    %s38 = sor.u32 %s36, %s37
    %p39 = scmp.eq.s32.totalorder %s38, 0
    %s41 = sadd.s32 %s40, 1
    %s42 = scalar_select %p39, %s40, %s41
    %p45 = pneg %p39
    %p46 = scmp.eq.s32.totalorder %s9, 1
    %p47 = por %p45, %p46
    %p48 = scmp.ne.s32.totalorder %s40, %s43
    %p49 = scmp.eq.s32.totalorder %s9, 0
    %p50 = por %p48, %p49
    %p51 = scmp.ne.s32.totalorder %s40, %s43
    %p52 = scmp.eq.s32.totalorder %s14, 1
    %p53 = por %p51, %p52
    %p54 = scmp.ne.s32.totalorder %s43, %s44
    %p55 = scmp.eq.s32.totalorder %s14, 0
    %p56 = por %p54, %p55
    %p57 = scmp.ne.s32.totalorder %s43, %s44
    %p58 = scmp.eq.s32.totalorder %s15, 1
    %p59 = por %p57, %p58
    %p61 = scmp.ne.s32.totalorder %s44, %s60
    %p62 = scmp.eq.s32.totalorder %s15, 0
    %p63 = por %p61, %p62
    %s64 = ssub.s32 %s16, %s35
    %s65 = ssub.s32 %s18, %s27
    %s66 = sor.u32 %s64, %s65
    %p67 = scmp.eq.s32.totalorder %s66, 0
    %s69 = sadd.s32 %s68, 1
    %s70 = scalar_select %p67, %s68, %s69
    %p73 = pneg %p67
    %p74 = scmp.eq.s32.totalorder %s9, 1
    %p75 = por %p73, %p74
    %p76 = scmp.ne.s32.totalorder %s68, %s71
    %p77 = scmp.eq.s32.totalorder %s9, 0
    %p78 = por %p76, %p77
    %p79 = scmp.ne.s32.totalorder %s68, %s71
    %p80 = scmp.eq.s32.totalorder %s14, 1
    %p81 = por %p79, %p80
    %p82 = scmp.ne.s32.totalorder %s71, %s72
    %p83 = scmp.eq.s32.totalorder %s14, 0
    %p84 = por %p82, %p83
    %p85 = scmp.ne.s32.totalorder %s71, %s72
    %p86 = scmp.eq.s32.totalorder %s15, 1
    %p87 = por %p85, %p86
    %p89 = scmp.ne.s32.totalorder %s72, %s88
    %p90 = scmp.eq.s32.totalorder %s15, 0
    %p91 = por %p89, %p90
    %s92 = ssub.s32 %s16, %s35
    %s93 = ssub.s32 %s18, %s27
    %s94 = sor.u32 %s92, %s93
    %p95 = scmp.eq.s32.totalorder %s94, 0
    %s97 = sadd.s32 %s96, 1
    %s98 = scalar_select %p95, %s96, %s97
    %p101 = pneg %p95
    %p102 = scmp.eq.s32.totalorder %s9, 1
    %p103 = por %p101, %p102
    %p104 = scmp.ne.s32.totalorder %s96, %s99
    %p105 = scmp.eq.s32.totalorder %s9, 0
    %p106 = por %p104, %p105
    %p107 = scmp.ne.s32.totalorder %s96, %s99
    %p108 = scmp.eq.s32.totalorder %s14, 1
    %p109 = por %p107, %p108
    %p110 = scmp.ne.s32.totalorder %s99, %s100
    %p111 = scmp.eq.s32.totalorder %s14, 0
    %p112 = por %p110, %p111
    %p113 = scmp.ne.s32.totalorder %s99, %s100
    %p114 = scmp.eq.s32.totalorder %s15, 1
    %p115 = por %p113, %p114
    %p117 = scmp.ne.s32.totalorder %s100, %s116
    %p118 = scmp.eq.s32.totalorder %s15, 0
    %p119 = por %p117, %p118
    %s120 = ssub.s32 %s16, %s35
    %s121 = ssub.s32 %s17, %s31
    %s122 = sor.u32 %s120, %s121
    %p123 = scmp.eq.s32.totalorder %s122, 0
    %s125 = sadd.s32 %s124, 1
    %s126 = scalar_select %p123, %s124, %s125
    %p129 = pneg %p123
    %p130 = scmp.eq.s32.totalorder %s9, 1
    %p131 = por %p129, %p130
    %p132 = scmp.ne.s32.totalorder %s124, %s127
    %p133 = scmp.eq.s32.totalorder %s9, 0
    %p134 = por %p132, %p133
    %p135 = scmp.ne.s32.totalorder %s124, %s127
    %p136 = scmp.eq.s32.totalorder %s14, 1
    %p137 = por %p135, %p136
    %p138 = scmp.ne.s32.totalorder %s127, %s128
    %p139 = scmp.eq.s32.totalorder %s14, 0
    %p140 = por %p138, %p139
    %p141 = scmp.ne.s32.totalorder %s127, %s128
    %p142 = scmp.eq.s32.totalorder %s15, 1
    %p143 = por %p141, %p142
    %p145 = scmp.ne.s32.totalorder %s128, %s144
    %p146 = scmp.eq.s32.totalorder %s15, 0
    %p147 = por %p145, %p146
    %p148 = scmp.le.s32.totalorder 1, %s9
    %p149 = scmp.lt.s32.totalorder %s9, 3
    %p150 = pnand %p148, %p149
    %p151 = pneg %p150
    // Predicated region
    $region9: #{multi_head_attention.4} parent=5 // pred_check
      _
    $region10: #{multi_head_attention.4} parent=5 // pred_check_branch
      %153 = sbr.rel (%p150) target = $region12
    $region11: #{multi_head_attention.4} parent=5 // pred_region
      %s154 = ssub.s32 %s9, 1
    $region12: #{multi_head_attention.4} parent=5 // pred_fallthru
      _
    %p155 = scmp.lt.s32.totalorder %s9, 2
    // Predicated region
    $region13: #{multi_head_attention.4} parent=5 // pred_check
      %p156 = pneg %p155
    $region14: #{multi_head_attention.4} parent=5 // pred_check_branch
      %158 = sbr.rel (%p156) target = $region16
    $region15: #{multi_head_attention.4} parent=5 // pred_region
      // Predicated region
      $region17: #{multi_head_attention.4} parent=15 // pred_check
        %p159 = pneg %p50
      $region18: #{multi_head_attention.4} parent=15 // pred_check_branch
        %161 = sbr.rel (%p159) target = $region20
      $region19: #{multi_head_attention.4} parent=15 // pred_region
        %p162 = scmp.lt.s32.totalorder %s16, 1
        %s163 = scalar_select %p162, %s16, 1
        %p164 = scmp.lt.s32.totalorder %s17, 0
        %s165 = scalar_select %p164, %s17, 0
        %s166 = sadd.s32 %s165, %s163
        %s167 = smul.addr %s166, 8
        %s168 = scalar_lea.vmem %s0, %s167
      $region20: #{multi_head_attention.4} parent=15 // pred_fallthru
        _
      // Predicated region
      $region21: #{multi_head_attention.4} parent=15 // pred_check
        %p169 = pneg %p78
      $region22: #{multi_head_attention.4} parent=15 // pred_check_branch
        %171 = sbr.rel (%p169) target = $region24
      $region23: #{multi_head_attention.4} parent=15 // pred_region
        %p172 = scmp.lt.s32.totalorder %s16, 1
        %s173 = scalar_select %p172, %s16, 1
        %p174 = scmp.lt.s32.totalorder %s18, 0
        %s175 = scalar_select %p174, %s18, 0
        %s176 = sadd.s32 %s175, %s173
        %s177 = sadd.s32 %s176, 2
        %s178 = smul.addr %s177, 8
        %s179 = scalar_lea.vmem %s1, %s178
      $region24: #{multi_head_attention.4} parent=15 // pred_fallthru
        _
      // Predicated region
      $region25: #{multi_head_attention.4} parent=15 // pred_check
        %p180 = pneg %p106
      $region26: #{multi_head_attention.4} parent=15 // pred_check_branch
        %182 = sbr.rel (%p180) target = $region28
      $region27: #{multi_head_attention.4} parent=15 // pred_region
        %p183 = scmp.lt.s32.totalorder %s16, 1
        %s184 = scalar_select %p183, %s16, 1
        %p185 = scmp.lt.s32.totalorder %s18, 0
        %s186 = scalar_select %p185, %s18, 0
        %s187 = sadd.s32 %s186, %s184
        %s188 = sadd.s32 %s187, 4
        %s189 = smul.addr %s188, 8
        %s190 = scalar_lea.vmem %s2, %s189
      $region28: #{multi_head_attention.4} parent=15 // pred_fallthru
        _
    $region16: #{multi_head_attention.4} parent=5 // pred_fallthru
      _
    %p191 = scmp.le.s32.totalorder 1, %s9
    %p192 = scmp.lt.s32.totalorder %s9, 3
    %p193 = pnand %p191, %p192
    %p194 = pneg %p193
    // Predicated region
    $region29: #{multi_head_attention.4} parent=5 // pred_check
      _
    $region30: #{multi_head_attention.4} parent=5 // pred_check_branch
      %196 = sbr.rel (%p193) target = $region32
    $region31: #{multi_head_attention.4} parent=5 // pred_region
      %s197 = ssub.s32 %s9, 1
      %p198 = scmp.lt.s32.totalorder %s19, 1
      %s199 = scalar_select %p198, %s19, 1
      %p200 = scmp.lt.s32.totalorder %s20, 0
      %s201 = scalar_select %p200, %s20, 0
      %s202 = sadd.s32 %s201, %s199
      %s203 = smul.addr %s202, 8
      %s204 = scalar_lea.vmem %s0, %s203
      %p205 = pneg %p56
      %p206 = pneg %p53
      %p207 = scmp.lt.s32.totalorder %s19, 1
      %s208 = scalar_select %p207, %s19, 1
      %p209 = scmp.lt.s32.totalorder %s21, 0
      %s210 = scalar_select %p209, %s21, 0
      %s211 = sadd.s32 %s210, %s208
      %s212 = sadd.s32 %s211, 2
      %s213 = smul.addr %s212, 8
      %s214 = scalar_lea.vmem %s1, %s213
      %p215 = pneg %p84
      %p216 = pneg %p81
      %p217 = scmp.lt.s32.totalorder %s19, 1
      %s218 = scalar_select %p217, %s19, 1
      %p219 = scmp.lt.s32.totalorder %s21, 0
      %s220 = scalar_select %p219, %s21, 0
      %s221 = sadd.s32 %s220, %s218
      %s222 = sadd.s32 %s221, 4
      %s223 = smul.addr %s222, 8
      %s224 = scalar_lea.vmem %s2, %s223
      %p225 = pneg %p112
      %p226 = pneg %p109
      %p227 = pneg %p140
      %p228 = pneg %p137
      %p229 = scmp.lt.s32.totalorder %s19, 1
      %s230 = scalar_select %p229, %s19, 1
      %p231 = scmp.lt.s32.totalorder %s20, 0
      %s232 = scalar_select %p231, %s20, 0
      %s233 = sadd.s32 %s232, %s230
      %s234 = smul.addr %s233, 8
      %s235 = scalar_lea.vmem %s3, %s234
      %p236 = scmp.lt.s32.totalorder %s19, 1
      %s237 = scalar_select %p236, %s19, 1
      %p238 = scmp.lt.s32.totalorder %s20, 0
      %s239 = scalar_select %p238, %s20, 0
      %s240 = sadd.s32 %s239, %s237
      %s241 = smul.addr %s240, 8
      %s242 = scalar_lea.vmem %s0, %s241
      %p243 = scmp.lt.s32.totalorder %s19, 1
      %s244 = scalar_select %p243, %s19, 1
      %p245 = scmp.lt.s32.totalorder %s21, 0
      %s246 = scalar_select %p245, %s21, 0
      %s247 = sadd.s32 %s246, %s244
      %s248 = sadd.s32 %s247, 2
      %s249 = smul.addr %s248, 8
      %s250 = scalar_lea.vmem %s1, %s249
      %p251 = scmp.lt.s32.totalorder %s19, 1
      %s252 = scalar_select %p251, %s19, 1
      %p253 = scmp.lt.s32.totalorder %s21, 0
      %s254 = scalar_select %p253, %s21, 0
      %s255 = sadd.s32 %s254, %s252
      %s256 = sadd.s32 %s255, 4
      %s257 = smul.addr %s256, 8
      %s258 = scalar_lea.vmem %s2, %s257
      %p259 = scmp.lt.s32.totalorder %s19, 1
      %s260 = scalar_select %p259, %s19, 1
      %p261 = scmp.lt.s32.totalorder %s20, 0
      %s262 = scalar_select %p261, %s20, 0
      %s263 = sadd.s32 %s262, %s260
      %s264 = smul.addr %s263, 8
      %s265 = scalar_lea.vmem %s3, %s264
      %p266 = scmp.eq.s32.totalorder %s21, 0
      // Predicated region
      $region33: #{multi_head_attention.4} parent=31 // pred_check
        %p267 = pneg %p266
      $region34: #{multi_head_attention.4} parent=31 // pred_check_branch
        %269 = sbr.rel (%p267) target = $region36
      $region35: #{multi_head_attention.4} parent=31 // pred_region
        %vm270 = vcmask 31744
        %271 = vst.msk [vmem:[#allocation2] sm:$0xff] %vm270, -inf
        %272 = vst.msk [vmem:[#allocation3] sm:$0xff] %vm270, 0.0
        %vm273 = vcmask 261120
        %274 = vst.msk [vmem:[#allocation4] sm:$0xff] %vm273, 0.0
      $region36: #{multi_head_attention.4} parent=31 // pred_fallthru
        _
      %v275 = vld [vmem:[%s242] sm:$0xff]
      %v276 = vmul.f32 %v275, 0.35355338
      %v277 = vld [vmem:[%s250] sm:$0xff]
      %v278 = vld [vmem:[%s258] sm:$0xff]
      %vm279 = vcmask 64512
      %v281 = vsel %vm279, %v276, 0
      %v284 = vsel %vm279, %v277, 0
      %286 = vmatprep.subr.mxu0 0.0
      %287 = vmatpush1.xpose.msra.mxu0 %v284
      %288 = vmatprep.subr.mxu0 0.0
      %289 = vmatpush1.xpose.msra.mxu0 0.0
      %290 = vmatprep.subr.mxu0 0.0
      %291 = vmatpush1.xpose.msra.mxu0 0.0
      %292 = vmatprep.subr.mxu0 0.0
      %293 = vmatpush1.xpose.msra.mxu0 0.0
      %294 = vmatprep.subr.mxu0 0.0
      %295 = vmatpush1.xpose.msra.mxu0 0.0
      %296 = vmatprep.subr.mxu0 0.0
      %297 = vmatpush1.xpose.msra.mxu0 0.0
      %298 = vmatprep.subr.mxu0 0.0
      %299 = vmatpush1.xpose.msra.mxu0 0.0
      %300 = vmatprep.subr.mxu0 0.0
      %301 = vmatpush1.xpose.msra.mxu0 0.0
      %302 = vmatprep.subr.mxu0 0.0
      %303 = vmatpush1.xpose.msra.mxu0 0.0
      %304 = vmatprep.subr.mxu0 0.0
      %305 = vmatpush1.xpose.msra.mxu0 0.0
      %306 = vmatprep.subr.mxu0 0.0
      %307 = vmatpush1.xpose.msra.mxu0 0.0
      %308 = vmatprep.subr.mxu0 0.0
      %309 = vmatpush1.xpose.msra.mxu0 0.0
      %310 = vmatprep.subr.mxu0 0.0
      %311 = vmatpush1.xpose.msra.mxu0 0.0
      %312 = vmatprep.subr.mxu0 0.0
      %313 = vmatpush1.xpose.msra.mxu0 0.0
      %314 = vmatprep.subr.mxu0 0.0
      %315 = vmatpush1.xpose.msra.mxu0 0.0
      %316 = vmatprep.subr.mxu0 0.0
      %317 = vmatpush1.xpose.msra.mxu0 0.0
      %318 = vmatprep.subr.mxu0 0.0
      %319 = vmatpush1.xpose.msra.mxu0 0.0
      %320 = vmatprep.subr.mxu0 0.0
      %321 = vmatpush1.xpose.msra.mxu0 0.0
      %322 = vmatprep.subr.mxu0 0.0
      %323 = vmatpush1.xpose.msra.mxu0 0.0
      %324 = vmatprep.subr.mxu0 0.0
      %325 = vmatpush1.xpose.msra.mxu0 0.0
      %326 = vmatprep.subr.mxu0 0.0
      %327 = vmatpush1.xpose.msra.mxu0 0.0
      %328 = vmatprep.subr.mxu0 0.0
      %329 = vmatpush1.xpose.msra.mxu0 0.0
      %330 = vmatprep.subr.mxu0 0.0
      %331 = vmatpush1.xpose.msra.mxu0 0.0
      %332 = vmatprep.subr.mxu0 0.0
      %333 = vmatpush1.xpose.msra.mxu0 0.0
      %334 = vmatprep.subr.mxu0 0.0
      %335 = vmatpush1.xpose.msra.mxu0 0.0
      %336 = vmatprep.subr.mxu0 0.0
      %337 = vmatpush1.xpose.msra.mxu0 0.0
      %338 = vmatprep.subr.mxu0 0.0
      %339 = vmatpush1.xpose.msra.mxu0 0.0
      %340 = vmatprep.subr.mxu0 0.0
      %341 = vmatpush1.xpose.msra.mxu0 0.0
      %342 = vmatprep.subr.mxu0 0.0
      %343 = vmatpush1.xpose.msra.mxu0 0.0
      %344 = vmatprep.subr.mxu0 0.0
      %345 = vmatpush1.xpose.msra.mxu0 0.0
      %346 = vmatprep.subr.mxu0 0.0
      %347 = vmatpush1.xpose.msra.mxu0 0.0
      %348 = vmatprep.subr.mxu0 0.0
      %349 = vmatpush1.xpose.msra.mxu0 0.0
      %350 = vmatprep.mubr.f32.mxu0 0.0
      %351 = vmatmul.mubr.f32.gmra.mrb[0].mxu0 %v281
      %v352 = vpop.f32.mrb[0].mxu0
      %v353 = vadd.f32 0.0, %v352
      %v354 = vpop.f32.mrb[0].mxu0
      %355 = vdwg.mxu0
      %356 = vrot.lane.b32.xlu0 %v276, 120
      %v357 = vpop.permute.xlu0 %356
      %358 = vrot.lane.b32.xlu0 %v277, 120
      %v359 = vpop.permute.xlu0 %358
      %v360 = vsel %vm279, %v357, 0
      %v362 = vsel %vm279, %v359, 0
      %364 = vmatprep.subr.mxu0 0.0
      %365 = vmatpush1.xpose.msra.mxu0 %v362
      %366 = vmatprep.subr.mxu0 0.0
      %367 = vmatpush1.xpose.msra.mxu0 0.0
      %368 = vmatprep.subr.mxu0 0.0
      %369 = vmatpush1.xpose.msra.mxu0 0.0
      %370 = vmatprep.subr.mxu0 0.0
      %371 = vmatpush1.xpose.msra.mxu0 0.0
      %372 = vmatprep.subr.mxu0 0.0
      %373 = vmatpush1.xpose.msra.mxu0 0.0
      %374 = vmatprep.subr.mxu0 0.0
      %375 = vmatpush1.xpose.msra.mxu0 0.0
      %376 = vmatprep.subr.mxu0 0.0
      %377 = vmatpush1.xpose.msra.mxu0 0.0
      %378 = vmatprep.subr.mxu0 0.0
      %379 = vmatpush1.xpose.msra.mxu0 0.0
      %380 = vmatprep.subr.mxu0 0.0
      %381 = vmatpush1.xpose.msra.mxu0 0.0
      %382 = vmatprep.subr.mxu0 0.0
      %383 = vmatpush1.xpose.msra.mxu0 0.0
      %384 = vmatprep.subr.mxu0 0.0
      %385 = vmatpush1.xpose.msra.mxu0 0.0
      %386 = vmatprep.subr.mxu0 0.0
      %387 = vmatpush1.xpose.msra.mxu0 0.0
      %388 = vmatprep.subr.mxu0 0.0
      %389 = vmatpush1.xpose.msra.mxu0 0.0
      %390 = vmatprep.subr.mxu0 0.0
      %391 = vmatpush1.xpose.msra.mxu0 0.0
      %392 = vmatprep.subr.mxu0 0.0
      %393 = vmatpush1.xpose.msra.mxu0 0.0
      %394 = vmatprep.subr.mxu0 0.0
      %395 = vmatpush1.xpose.msra.mxu0 0.0
      %396 = vmatprep.subr.mxu0 0.0
      %397 = vmatpush1.xpose.msra.mxu0 0.0
      %398 = vmatprep.subr.mxu0 0.0
      %399 = vmatpush1.xpose.msra.mxu0 0.0
      %400 = vmatprep.subr.mxu0 0.0
      %401 = vmatpush1.xpose.msra.mxu0 0.0
      %402 = vmatprep.subr.mxu0 0.0
      %403 = vmatpush1.xpose.msra.mxu0 0.0
      %404 = vmatprep.subr.mxu0 0.0
      %405 = vmatpush1.xpose.msra.mxu0 0.0
      %406 = vmatprep.subr.mxu0 0.0
      %407 = vmatpush1.xpose.msra.mxu0 0.0
      %408 = vmatprep.subr.mxu0 0.0
      %409 = vmatpush1.xpose.msra.mxu0 0.0
      %410 = vmatprep.subr.mxu0 0.0
      %411 = vmatpush1.xpose.msra.mxu0 0.0
      %412 = vmatprep.subr.mxu0 0.0
      %413 = vmatpush1.xpose.msra.mxu0 0.0
      %414 = vmatprep.subr.mxu0 0.0
      %415 = vmatpush1.xpose.msra.mxu0 0.0
      %416 = vmatprep.subr.mxu0 0.0
      %417 = vmatpush1.xpose.msra.mxu0 0.0
      %418 = vmatprep.subr.mxu0 0.0
      %419 = vmatpush1.xpose.msra.mxu0 0.0
      %420 = vmatprep.subr.mxu0 0.0
      %421 = vmatpush1.xpose.msra.mxu0 0.0
      %422 = vmatprep.subr.mxu0 0.0
      %423 = vmatpush1.xpose.msra.mxu0 0.0
      %424 = vmatprep.subr.mxu0 0.0
      %425 = vmatpush1.xpose.msra.mxu0 0.0
      %426 = vmatprep.subr.mxu0 0.0
      %427 = vmatpush1.xpose.msra.mxu0 0.0
      %428 = vmatprep.mubr.f32.mxu0 0.0
      %429 = vmatmul.mubr.f32.gmra.mrb[0].mxu0 %v360
      %v430 = vpop.f32.mrb[0].mxu0
      %v431 = vadd.f32 0.0, %v430
      %v432 = vpop.f32.mrb[0].mxu0
      %433 = vdwg.mxu0
      %434 = vrot.lane.b32.xlu0 %v276, 112
      %v435 = vpop.permute.xlu0 %434
      %436 = vrot.lane.b32.xlu0 %v277, 112
      %v437 = vpop.permute.xlu0 %436
      %v438 = vsel %vm279, %v435, 0
      %v440 = vsel %vm279, %v437, 0
      %442 = vmatprep.subr.mxu0 0.0
      %443 = vmatpush1.xpose.msra.mxu0 %v440
      %444 = vmatprep.subr.mxu0 0.0
      %445 = vmatpush1.xpose.msra.mxu0 0.0
      %446 = vmatprep.subr.mxu0 0.0
      %447 = vmatpush1.xpose.msra.mxu0 0.0
      %448 = vmatprep.subr.mxu0 0.0
      %449 = vmatpush1.xpose.msra.mxu0 0.0
      %450 = vmatprep.subr.mxu0 0.0
      %451 = vmatpush1.xpose.msra.mxu0 0.0
      %452 = vmatprep.subr.mxu0 0.0
      %453 = vmatpush1.xpose.msra.mxu0 0.0
      %454 = vmatprep.subr.mxu0 0.0
      %455 = vmatpush1.xpose.msra.mxu0 0.0
      %456 = vmatprep.subr.mxu0 0.0
      %457 = vmatpush1.xpose.msra.mxu0 0.0
      %458 = vmatprep.subr.mxu0 0.0
      %459 = vmatpush1.xpose.msra.mxu0 0.0
      %460 = vmatprep.subr.mxu0 0.0
      %461 = vmatpush1.xpose.msra.mxu0 0.0
      %462 = vmatprep.subr.mxu0 0.0
      %463 = vmatpush1.xpose.msra.mxu0 0.0
      %464 = vmatprep.subr.mxu0 0.0
      %465 = vmatpush1.xpose.msra.mxu0 0.0
      %466 = vmatprep.subr.mxu0 0.0
      %467 = vmatpush1.xpose.msra.mxu0 0.0
      %468 = vmatprep.subr.mxu0 0.0
      %469 = vmatpush1.xpose.msra.mxu0 0.0
      %470 = vmatprep.subr.mxu0 0.0
      %471 = vmatpush1.xpose.msra.mxu0 0.0
      %472 = vmatprep.subr.mxu0 0.0
      %473 = vmatpush1.xpose.msra.mxu0 0.0
      %474 = vmatprep.subr.mxu0 0.0
      %475 = vmatpush1.xpose.msra.mxu0 0.0
      %476 = vmatprep.subr.mxu0 0.0
      %477 = vmatpush1.xpose.msra.mxu0 0.0
      %478 = vmatprep.subr.mxu0 0.0
      %479 = vmatpush1.xpose.msra.mxu0 0.0
      %480 = vmatprep.subr.mxu0 0.0
      %481 = vmatpush1.xpose.msra.mxu0 0.0
      %482 = vmatprep.subr.mxu0 0.0
      %483 = vmatpush1.xpose.msra.mxu0 0.0
      %484 = vmatprep.subr.mxu0 0.0
      %485 = vmatpush1.xpose.msra.mxu0 0.0
      %486 = vmatprep.subr.mxu0 0.0
      %487 = vmatpush1.xpose.msra.mxu0 0.0
      %488 = vmatprep.subr.mxu0 0.0
      %489 = vmatpush1.xpose.msra.mxu0 0.0
      %490 = vmatprep.subr.mxu0 0.0
      %491 = vmatpush1.xpose.msra.mxu0 0.0
      %492 = vmatprep.subr.mxu0 0.0
      %493 = vmatpush1.xpose.msra.mxu0 0.0
      %494 = vmatprep.subr.mxu0 0.0
      %495 = vmatpush1.xpose.msra.mxu0 0.0
      %496 = vmatprep.subr.mxu0 0.0
      %497 = vmatpush1.xpose.msra.mxu0 0.0
      %498 = vmatprep.subr.mxu0 0.0
      %499 = vmatpush1.xpose.msra.mxu0 0.0
      %500 = vmatprep.subr.mxu0 0.0
      %501 = vmatpush1.xpose.msra.mxu0 0.0
      %502 = vmatprep.subr.mxu0 0.0
      %503 = vmatpush1.xpose.msra.mxu0 0.0
      %504 = vmatprep.subr.mxu0 0.0
      %505 = vmatpush1.xpose.msra.mxu0 0.0
      %506 = vmatprep.mubr.f32.mxu0 0.0
      %507 = vmatmul.mubr.f32.gmra.mrb[0].mxu0 %v438
      %v508 = vpop.f32.mrb[0].mxu0
      %v509 = vadd.f32 0.0, %v508
      %v510 = vpop.f32.mrb[0].mxu0
      %511 = vdwg.mxu0
      %512 = vrot.lane.b32.xlu0 %v276, 104
      %v513 = vpop.permute.xlu0 %512
      %514 = vrot.lane.b32.xlu0 %v277, 104
      %v515 = vpop.permute.xlu0 %514
      %v516 = vsel %vm279, %v513, 0
      %v518 = vsel %vm279, %v515, 0
      %520 = vmatprep.subr.mxu0 0.0
      %521 = vmatpush1.xpose.msra.mxu0 %v518
      %522 = vmatprep.subr.mxu0 0.0
      %523 = vmatpush1.xpose.msra.mxu0 0.0
      %524 = vmatprep.subr.mxu0 0.0
      %525 = vmatpush1.xpose.msra.mxu0 0.0
      %526 = vmatprep.subr.mxu0 0.0
      %527 = vmatpush1.xpose.msra.mxu0 0.0
      %528 = vmatprep.subr.mxu0 0.0
      %529 = vmatpush1.xpose.msra.mxu0 0.0
      %530 = vmatprep.subr.mxu0 0.0
      %531 = vmatpush1.xpose.msra.mxu0 0.0
      %532 = vmatprep.subr.mxu0 0.0
      %533 = vmatpush1.xpose.msra.mxu0 0.0
      %534 = vmatprep.subr.mxu0 0.0
      %535 = vmatpush1.xpose.msra.mxu0 0.0
      %536 = vmatprep.subr.mxu0 0.0
      %537 = vmatpush1.xpose.msra.mxu0 0.0
      %538 = vmatprep.subr.mxu0 0.0
      %539 = vmatpush1.xpose.msra.mxu0 0.0
      %540 = vmatprep.subr.mxu0 0.0
      %541 = vmatpush1.xpose.msra.mxu0 0.0
      %542 = vmatprep.subr.mxu0 0.0
      %543 = vmatpush1.xpose.msra.mxu0 0.0
      %544 = vmatprep.subr.mxu0 0.0
      %545 = vmatpush1.xpose.msra.mxu0 0.0
      %546 = vmatprep.subr.mxu0 0.0
      %547 = vmatpush1.xpose.msra.mxu0 0.0
      %548 = vmatprep.subr.mxu0 0.0
      %549 = vmatpush1.xpose.msra.mxu0 0.0
      %550 = vmatprep.subr.mxu0 0.0
      %551 = vmatpush1.xpose.msra.mxu0 0.0
      %552 = vmatprep.subr.mxu0 0.0
      %553 = vmatpush1.xpose.msra.mxu0 0.0
      %554 = vmatprep.subr.mxu0 0.0
      %555 = vmatpush1.xpose.msra.mxu0 0.0
      %556 = vmatprep.subr.mxu0 0.0
      %557 = vmatpush1.xpose.msra.mxu0 0.0
      %558 = vmatprep.subr.mxu0 0.0
      %559 = vmatpush1.xpose.msra.mxu0 0.0
      %560 = vmatprep.subr.mxu0 0.0
      %561 = vmatpush1.xpose.msra.mxu0 0.0
      %562 = vmatprep.subr.mxu0 0.0
      %563 = vmatpush1.xpose.msra.mxu0 0.0
      %564 = vmatprep.subr.mxu0 0.0
      %565 = vmatpush1.xpose.msra.mxu0 0.0
      %566 = vmatprep.subr.mxu0 0.0
      %567 = vmatpush1.xpose.msra.mxu0 0.0
      %568 = vmatprep.subr.mxu0 0.0
      %569 = vmatpush1.xpose.msra.mxu0 0.0
      %570 = vmatprep.subr.mxu0 0.0
      %571 = vmatpush1.xpose.msra.mxu0 0.0
      %572 = vmatprep.subr.mxu0 0.0
      %573 = vmatpush1.xpose.msra.mxu0 0.0
      %574 = vmatprep.subr.mxu0 0.0
      %575 = vmatpush1.xpose.msra.mxu0 0.0
      %576 = vmatprep.subr.mxu0 0.0
      %577 = vmatpush1.xpose.msra.mxu0 0.0
      %578 = vmatprep.subr.mxu0 0.0
      %579 = vmatpush1.xpose.msra.mxu0 0.0
      %580 = vmatprep.subr.mxu0 0.0
      %581 = vmatpush1.xpose.msra.mxu0 0.0
      %582 = vmatprep.subr.mxu0 0.0
      %583 = vmatpush1.xpose.msra.mxu0 0.0
      %584 = vmatprep.mubr.f32.mxu0 0.0
      %585 = vmatmul.mubr.f32.gmra.mrb[0].mxu0 %v516
      %v586 = vpop.f32.mrb[0].mxu0
      %v587 = vadd.f32 0.0, %v586
      %v588 = vpop.f32.mrb[0].mxu0
      %589 = vdwg.mxu0
      %v590 = vld [vmem:[#allocation2] sm:$0xff]
      %v591 = vld [vmem:[#allocation3] sm:$0xff]
      %v592 = vsel %vm279, %v353, -inf
      %593 = vmax.xlane.f32.xlu0 %v592
      %v594 = vpop.xlane.xlu0 %593
      %v595 = vsel %vm279, %v431, -inf
      %596 = vmax.xlane.f32.xlu0 %v595
      %v597 = vpop.xlane.xlu0 %596
      %v598 = vsel %vm279, %v509, -inf
      %599 = vmax.xlane.f32.xlu0 %v598
      %v600 = vpop.xlane.xlu0 %599
      %v601 = vsel %vm279, %v587, -inf
      %602 = vmax.xlane.f32.xlu0 %v601
      %v603 = vpop.xlane.xlu0 %602
      %vm604 = vcmask 7168
      %v605 = vsel %vm604, %v594, %v597
      %vm606 = vcmask 15360
      %v607 = vsel %vm606, %v605, %v600
      %vm608 = vcmask 23552
      %v609 = vsel %vm608, %v607, %v603
      %v610 = vmax.f32 %v590, %v609
      %v611 = vsub.f32 %v590, %v610
      %v612 = vmul.f32 %v611, 1.442695
      %v613 = vpow.pop %v612
      %615 = vset.pattern.permute.xlu0 0
      %616 = vperm.xlu0 %615, %v610
      %v617 = vpop.permute.xlu0 %616
      %v619 = vsub.f32 %v353, %v617
      %v620 = vmul.f32 %v619, 1.442695
      %v621 = vpow.pop %v620
      %622 = vset.pattern.permute.xlu0 1
      %623 = vperm.xlu0 %622, %v610
      %v624 = vpop.permute.xlu0 %623
      %v626 = vsub.f32 %v431, %v624
      %v627 = vmul.f32 %v626, 1.442695
      %v628 = vpow.pop %v627
      %629 = vset.pattern.permute.xlu0 2
      %630 = vperm.xlu0 %629, %v610
      %v631 = vpop.permute.xlu0 %630
      %v633 = vsub.f32 %v509, %v631
      %v634 = vmul.f32 %v633, 1.442695
      %v635 = vpow.pop %v634
      %636 = vset.pattern.permute.xlu0 3
      %637 = vperm.xlu0 %636, %v610
      %v638 = vpop.permute.xlu0 %637
      %v640 = vsub.f32 %v587, %v638
      %v641 = vmul.f32 %v640, 1.442695
      %v642 = vpow.pop %v641
      %v643 = vmul.f32 %v613, %v591
      %v644 = vsel %vm279, %v621, 0.0
      %645 = vadd.xlane.f32.xlu0 %v644
      %v646 = vpop.xlane.xlu0 %645
      %v647 = vsel %vm279, %v628, 0.0
      %648 = vadd.xlane.f32.xlu0 %v647
      %v649 = vpop.xlane.xlu0 %648
      %v650 = vsel %vm279, %v635, 0.0
      %651 = vadd.xlane.f32.xlu0 %v650
      %v652 = vpop.xlane.xlu0 %651
      %v653 = vsel %vm279, %v642, 0.0
      %654 = vadd.xlane.f32.xlu0 %v653
      %v655 = vpop.xlane.xlu0 %654
      %v656 = vsel %vm604, %v646, %v649
      %v657 = vsel %vm606, %v656, %v652
      %v658 = vsel %vm608, %v657, %v655
      %v659 = vadd.f32 %v643, %v658
      %vm660 = vcmask 31744
      %661 = vst.msk [vmem:[#allocation3] sm:$0xff] %vm660, %v659
      %662 = vst.msk [vmem:[#allocation2] sm:$0xff] %vm660, %v610
      %v664 = vsel %vm279, %v621, 0
      %666 = vmatprep.subr.mxu0 0.0
      %667 = vmatpush1.msra.mxu0 %v278
      %668 = vmatprep.subr.mxu0 0.0
      %669 = vmatpush1.msra.mxu0 0.0
      %670 = vmatprep.subr.mxu0 0.0
      %671 = vmatpush1.msra.mxu0 0.0
      %672 = vmatprep.subr.mxu0 0.0
      %673 = vmatpush1.msra.mxu0 0.0
      %674 = vmatprep.subr.mxu0 0.0
      %675 = vmatpush1.msra.mxu0 0.0
      %676 = vmatprep.subr.mxu0 0.0
      %677 = vmatpush1.msra.mxu0 0.0
      %678 = vmatprep.subr.mxu0 0.0
      %679 = vmatpush1.msra.mxu0 0.0
      %680 = vmatprep.subr.mxu0 0.0
      %681 = vmatpush1.msra.mxu0 0.0
      %682 = vmatprep.subr.mxu0 0.0
      %683 = vmatpush1.msra.mxu0 0.0
      %684 = vmatprep.subr.mxu0 0.0
      %685 = vmatpush1.msra.mxu0 0.0
      %686 = vmatprep.subr.mxu0 0.0
      %687 = vmatpush1.msra.mxu0 0.0
      %688 = vmatprep.subr.mxu0 0.0
      %689 = vmatpush1.msra.mxu0 0.0
      %690 = vmatprep.subr.mxu0 0.0
      %691 = vmatpush1.msra.mxu0 0.0
      %692 = vmatprep.subr.mxu0 0.0
      %693 = vmatpush1.msra.mxu0 0.0
      %694 = vmatprep.subr.mxu0 0.0
      %695 = vmatpush1.msra.mxu0 0.0
      %696 = vmatprep.subr.mxu0 0.0
      %697 = vmatpush1.msra.mxu0 0.0
      %698 = vmatprep.subr.mxu0 0.0
      %699 = vmatpush1.msra.mxu0 0.0
      %700 = vmatprep.subr.mxu0 0.0
      %701 = vmatpush1.msra.mxu0 0.0
      %702 = vmatprep.subr.mxu0 0.0
      %703 = vmatpush1.msra.mxu0 0.0
      %704 = vmatprep.subr.mxu0 0.0
      %705 = vmatpush1.msra.mxu0 0.0
      %706 = vmatprep.subr.mxu0 0.0
      %707 = vmatpush1.msra.mxu0 0.0
      %708 = vmatprep.subr.mxu0 0.0
      %709 = vmatpush1.msra.mxu0 0.0
      %710 = vmatprep.subr.mxu0 0.0
      %711 = vmatpush1.msra.mxu0 0.0
      %712 = vmatprep.subr.mxu0 0.0
      %713 = vmatpush1.msra.mxu0 0.0
      %714 = vmatprep.subr.mxu0 0.0
      %715 = vmatpush1.msra.mxu0 0.0
      %716 = vmatprep.subr.mxu0 0.0
      %717 = vmatpush1.msra.mxu0 0.0
      %718 = vmatprep.subr.mxu0 0.0
      %719 = vmatpush1.msra.mxu0 0.0
      %720 = vmatprep.subr.mxu0 0.0
      %721 = vmatpush1.msra.mxu0 0.0
      %722 = vmatprep.subr.mxu0 0.0
      %723 = vmatpush1.msra.mxu0 0.0
      %724 = vmatprep.subr.mxu0 0.0
      %725 = vmatpush1.msra.mxu0 0.0
      %726 = vmatprep.subr.mxu0 0.0
      %727 = vmatpush1.msra.mxu0 0.0
      %728 = vmatprep.subr.mxu0 0.0
      %729 = vmatpush1.msra.mxu0 0.0
      %730 = vmatprep.mubr.f32.mxu0 0.0
      %731 = vmatmul.mubr.f32.gmra.mrb[0].mxu0 %v664
      %v732 = vpop.f32.mrb[0].mxu0
      %v733 = vadd.f32 0.0, %v732
      %v734 = vpop.f32.mrb[0].mxu0
      %735 = vdwg.mxu0
      %737 = vrot.lane.b32.xlu0 %v278, 120
      %v738 = vpop.permute.xlu0 %737
      %v741 = vsel %vm279, %v628, 0
      %743 = vmatprep.subr.mxu0 0.0
      %744 = vmatpush1.msra.mxu0 %v738
      %745 = vmatprep.subr.mxu0 0.0
      %746 = vmatpush1.msra.mxu0 0.0
      %747 = vmatprep.subr.mxu0 0.0
      %748 = vmatpush1.msra.mxu0 0.0
      %749 = vmatprep.subr.mxu0 0.0
      %750 = vmatpush1.msra.mxu0 0.0
      %751 = vmatprep.subr.mxu0 0.0
      %752 = vmatpush1.msra.mxu0 0.0
      %753 = vmatprep.subr.mxu0 0.0
      %754 = vmatpush1.msra.mxu0 0.0
      %755 = vmatprep.subr.mxu0 0.0
      %756 = vmatpush1.msra.mxu0 0.0
      %757 = vmatprep.subr.mxu0 0.0
      %758 = vmatpush1.msra.mxu0 0.0
      %759 = vmatprep.subr.mxu0 0.0
      %760 = vmatpush1.msra.mxu0 0.0
      %761 = vmatprep.subr.mxu0 0.0
      %762 = vmatpush1.msra.mxu0 0.0
      %763 = vmatprep.subr.mxu0 0.0
      %764 = vmatpush1.msra.mxu0 0.0
      %765 = vmatprep.subr.mxu0 0.0
      %766 = vmatpush1.msra.mxu0 0.0
      %767 = vmatprep.subr.mxu0 0.0
      %768 = vmatpush1.msra.mxu0 0.0
      %769 = vmatprep.subr.mxu0 0.0
      %770 = vmatpush1.msra.mxu0 0.0
      %771 = vmatprep.subr.mxu0 0.0
      %772 = vmatpush1.msra.mxu0 0.0
      %773 = vmatprep.subr.mxu0 0.0
      %774 = vmatpush1.msra.mxu0 0.0
      %775 = vmatprep.subr.mxu0 0.0
      %776 = vmatpush1.msra.mxu0 0.0
      %777 = vmatprep.subr.mxu0 0.0
      %778 = vmatpush1.msra.mxu0 0.0
      %779 = vmatprep.subr.mxu0 0.0
      %780 = vmatpush1.msra.mxu0 0.0
      %781 = vmatprep.subr.mxu0 0.0
      %782 = vmatpush1.msra.mxu0 0.0
      %783 = vmatprep.subr.mxu0 0.0
      %784 = vmatpush1.msra.mxu0 0.0
      %785 = vmatprep.subr.mxu0 0.0
      %786 = vmatpush1.msra.mxu0 0.0
      %787 = vmatprep.subr.mxu0 0.0
      %788 = vmatpush1.msra.mxu0 0.0
      %789 = vmatprep.subr.mxu0 0.0
      %790 = vmatpush1.msra.mxu0 0.0
      %791 = vmatprep.subr.mxu0 0.0
      %792 = vmatpush1.msra.mxu0 0.0
      %793 = vmatprep.subr.mxu0 0.0
      %794 = vmatpush1.msra.mxu0 0.0
      %795 = vmatprep.subr.mxu0 0.0
      %796 = vmatpush1.msra.mxu0 0.0
      %797 = vmatprep.subr.mxu0 0.0
      %798 = vmatpush1.msra.mxu0 0.0
      %799 = vmatprep.subr.mxu0 0.0
      %800 = vmatpush1.msra.mxu0 0.0
      %801 = vmatprep.subr.mxu0 0.0
      %802 = vmatpush1.msra.mxu0 0.0
      %803 = vmatprep.subr.mxu0 0.0
      %804 = vmatpush1.msra.mxu0 0.0
      %805 = vmatprep.subr.mxu0 0.0
      %806 = vmatpush1.msra.mxu0 0.0
      %807 = vmatprep.mubr.f32.mxu0 0.0
      %808 = vmatmul.mubr.f32.gmra.mrb[0].mxu0 %v741
      %v809 = vpop.f32.mrb[0].mxu0
      %v810 = vadd.f32 0.0, %v809
      %v811 = vpop.f32.mrb[0].mxu0
      %812 = vdwg.mxu0
      %813 = vrot.lane.b32.xlu0 %v278, 112
      %v814 = vpop.permute.xlu0 %813
      %v817 = vsel %vm279, %v635, 0
      %819 = vmatprep.subr.mxu0 0.0
      %820 = vmatpush1.msra.mxu0 %v814
      %821 = vmatprep.subr.mxu0 0.0
      %822 = vmatpush1.msra.mxu0 0.0
      %823 = vmatprep.subr.mxu0 0.0
      %824 = vmatpush1.msra.mxu0 0.0
      %825 = vmatprep.subr.mxu0 0.0
      %826 = vmatpush1.msra.mxu0 0.0
      %827 = vmatprep.subr.mxu0 0.0
      %828 = vmatpush1.msra.mxu0 0.0
      %829 = vmatprep.subr.mxu0 0.0
      %830 = vmatpush1.msra.mxu0 0.0
      %831 = vmatprep.subr.mxu0 0.0
      %832 = vmatpush1.msra.mxu0 0.0
      %833 = vmatprep.subr.mxu0 0.0
      %834 = vmatpush1.msra.mxu0 0.0
      %835 = vmatprep.subr.mxu0 0.0
      %836 = vmatpush1.msra.mxu0 0.0
      %837 = vmatprep.subr.mxu0 0.0
      %838 = vmatpush1.msra.mxu0 0.0
      %839 = vmatprep.subr.mxu0 0.0
      %840 = vmatpush1.msra.mxu0 0.0
      %841 = vmatprep.subr.mxu0 0.0
      %842 = vmatpush1.msra.mxu0 0.0
      %843 = vmatprep.subr.mxu0 0.0
      %844 = vmatpush1.msra.mxu0 0.0
      %845 = vmatprep.subr.mxu0 0.0
      %846 = vmatpush1.msra.mxu0 0.0
      %847 = vmatprep.subr.mxu0 0.0
      %848 = vmatpush1.msra.mxu0 0.0
      %849 = vmatprep.subr.mxu0 0.0
      %850 = vmatpush1.msra.mxu0 0.0
      %851 = vmatprep.subr.mxu0 0.0
      %852 = vmatpush1.msra.mxu0 0.0
      %853 = vmatprep.subr.mxu0 0.0
      %854 = vmatpush1.msra.mxu0 0.0
      %855 = vmatprep.subr.mxu0 0.0
      %856 = vmatpush1.msra.mxu0 0.0
      %857 = vmatprep.subr.mxu0 0.0
      %858 = vmatpush1.msra.mxu0 0.0
      %859 = vmatprep.subr.mxu0 0.0
      %860 = vmatpush1.msra.mxu0 0.0
      %861 = vmatprep.subr.mxu0 0.0
      %862 = vmatpush1.msra.mxu0 0.0
      %863 = vmatprep.subr.mxu0 0.0
      %864 = vmatpush1.msra.mxu0 0.0
      %865 = vmatprep.subr.mxu0 0.0
      %866 = vmatpush1.msra.mxu0 0.0
      %867 = vmatprep.subr.mxu0 0.0
      %868 = vmatpush1.msra.mxu0 0.0
      %869 = vmatprep.subr.mxu0 0.0
      %870 = vmatpush1.msra.mxu0 0.0
      %871 = vmatprep.subr.mxu0 0.0
      %872 = vmatpush1.msra.mxu0 0.0
      %873 = vmatprep.subr.mxu0 0.0
      %874 = vmatpush1.msra.mxu0 0.0
      %875 = vmatprep.subr.mxu0 0.0
      %876 = vmatpush1.msra.mxu0 0.0
      %877 = vmatprep.subr.mxu0 0.0
      %878 = vmatpush1.msra.mxu0 0.0
      %879 = vmatprep.subr.mxu0 0.0
      %880 = vmatpush1.msra.mxu0 0.0
      %881 = vmatprep.subr.mxu0 0.0
      %882 = vmatpush1.msra.mxu0 0.0
      %883 = vmatprep.mubr.f32.mxu0 0.0
      %884 = vmatmul.mubr.f32.gmra.mrb[0].mxu0 %v817
      %v885 = vpop.f32.mrb[0].mxu0
      %v886 = vadd.f32 0.0, %v885
      %v887 = vpop.f32.mrb[0].mxu0
      %888 = vdwg.mxu0
      %889 = vrot.lane.b32.xlu0 %v278, 104
      %v890 = vpop.permute.xlu0 %889
      %v893 = vsel %vm279, %v642, 0
      %895 = vmatprep.subr.mxu0 0.0
      %896 = vmatpush1.msra.mxu0 %v890
      %897 = vmatprep.subr.mxu0 0.0
      %898 = vmatpush1.msra.mxu0 0.0
      %899 = vmatprep.subr.mxu0 0.0
      %900 = vmatpush1.msra.mxu0 0.0
      %901 = vmatprep.subr.mxu0 0.0
      %902 = vmatpush1.msra.mxu0 0.0
      %903 = vmatprep.subr.mxu0 0.0
      %904 = vmatpush1.msra.mxu0 0.0
      %905 = vmatprep.subr.mxu0 0.0
      %906 = vmatpush1.msra.mxu0 0.0
      %907 = vmatprep.subr.mxu0 0.0
      %908 = vmatpush1.msra.mxu0 0.0
      %909 = vmatprep.subr.mxu0 0.0
      %910 = vmatpush1.msra.mxu0 0.0
      %911 = vmatprep.subr.mxu0 0.0
      %912 = vmatpush1.msra.mxu0 0.0
      %913 = vmatprep.subr.mxu0 0.0
      %914 = vmatpush1.msra.mxu0 0.0
      %915 = vmatprep.subr.mxu0 0.0
      %916 = vmatpush1.msra.mxu0 0.0
      %917 = vmatprep.subr.mxu0 0.0
      %918 = vmatpush1.msra.mxu0 0.0
      %919 = vmatprep.subr.mxu0 0.0
      %920 = vmatpush1.msra.mxu0 0.0
      %921 = vmatprep.subr.mxu0 0.0
      %922 = vmatpush1.msra.mxu0 0.0
      %923 = vmatprep.subr.mxu0 0.0
      %924 = vmatpush1.msra.mxu0 0.0
      %925 = vmatprep.subr.mxu0 0.0
      %926 = vmatpush1.msra.mxu0 0.0
      %927 = vmatprep.subr.mxu0 0.0
      %928 = vmatpush1.msra.mxu0 0.0
      %929 = vmatprep.subr.mxu0 0.0
      %930 = vmatpush1.msra.mxu0 0.0
      %931 = vmatprep.subr.mxu0 0.0
      %932 = vmatpush1.msra.mxu0 0.0
      %933 = vmatprep.subr.mxu0 0.0
      %934 = vmatpush1.msra.mxu0 0.0
      %935 = vmatprep.subr.mxu0 0.0
      %936 = vmatpush1.msra.mxu0 0.0
      %937 = vmatprep.subr.mxu0 0.0
      %938 = vmatpush1.msra.mxu0 0.0
      %939 = vmatprep.subr.mxu0 0.0
      %940 = vmatpush1.msra.mxu0 0.0
      %941 = vmatprep.subr.mxu0 0.0
      %942 = vmatpush1.msra.mxu0 0.0
      %943 = vmatprep.subr.mxu0 0.0
      %944 = vmatpush1.msra.mxu0 0.0
      %945 = vmatprep.subr.mxu0 0.0
      %946 = vmatpush1.msra.mxu0 0.0
      %947 = vmatprep.subr.mxu0 0.0
      %948 = vmatpush1.msra.mxu0 0.0
      %949 = vmatprep.subr.mxu0 0.0
      %950 = vmatpush1.msra.mxu0 0.0
      %951 = vmatprep.subr.mxu0 0.0
      %952 = vmatpush1.msra.mxu0 0.0
      %953 = vmatprep.subr.mxu0 0.0
      %954 = vmatpush1.msra.mxu0 0.0
      %955 = vmatprep.subr.mxu0 0.0
      %956 = vmatpush1.msra.mxu0 0.0
      %957 = vmatprep.subr.mxu0 0.0
      %958 = vmatpush1.msra.mxu0 0.0
      %959 = vmatprep.mubr.f32.mxu0 0.0
      %960 = vmatmul.mubr.f32.gmra.mrb[0].mxu0 %v893
      %v961 = vpop.f32.mrb[0].mxu0
      %v962 = vadd.f32 0.0, %v961
      %v963 = vpop.f32.mrb[0].mxu0
      %964 = vdwg.mxu0
      %v965 = vld [vmem:[#allocation4] sm:$0xff]
      %967 = vset.pattern.permute.xlu0 0
      %968 = vperm.xlu0 %967, %v613
      %v969 = vpop.permute.xlu0 %968
      %v971 = vmul.f32 %v969, %v965
      %v972 = vadd.f32 %v971, %v733
      %973 = vset.pattern.permute.xlu0 1
      %974 = vperm.xlu0 %973, %v613
      %v975 = vpop.permute.xlu0 %974
      %v977 = vmul.f32 %v975, %v965
      %979 = vrot.lane.b32.xlu0 %v810, 8
      %v980 = vpop.permute.xlu0 %979
      %v982 = vadd.f32 %v977, %v980
      %983 = vset.pattern.permute.xlu0 2
      %984 = vperm.xlu0 %983, %v613
      %v985 = vpop.permute.xlu0 %984
      %v987 = vmul.f32 %v985, %v965
      %989 = vrot.lane.b32.xlu0 %v886, 16
      %v990 = vpop.permute.xlu0 %989
      %v992 = vadd.f32 %v987, %v990
      %993 = vset.pattern.permute.xlu0 3
      %994 = vperm.xlu0 %993, %v613
      %v995 = vpop.permute.xlu0 %994
      %v997 = vmul.f32 %v995, %v965
      %999 = vrot.lane.b32.xlu0 %v962, 24
      %v1000 = vpop.permute.xlu0 %999
      %v1002 = vadd.f32 %v997, %v1000
      %v1003 = vsel %vm279, %v972, %v982
      %vm1004 = vcmask 130048
      %v1005 = vsel %vm1004, %v1003, %v992
      %vm1006 = vcmask 195584
      %v1007 = vsel %vm1006, %v1005, %v1002
      %vm1008 = vcmask 261120
      %1009 = vst.msk [vmem:[#allocation4] sm:$0xff] %vm1008, %v1007
      // Predicated region
      $region37: #{multi_head_attention.4} parent=31 // pred_check
        %p1010 = pneg %p266
      $region38: #{multi_head_attention.4} parent=31 // pred_check_branch
        %1012 = sbr.rel (%p1010) target = $region40
      $region39: #{multi_head_attention.4} parent=31 // pred_region
        %v1013 = vld [vmem:[#allocation3] sm:$0xff]
        %v1014 = vrcp.pop %v1013
        %v1015 = vmul.f32 %v1013, %v1014
        %v1016 = vsub.f32 2.0, %v1015
        %v1017 = vmul.f32 %v1014, %v1016
        %v1018 = vld [vmem:[#allocation4] sm:$0xff]
        %1020 = vset.pattern.permute.xlu0 0
        %1021 = vperm.xlu0 %1020, %v1017
        %v1022 = vpop.permute.xlu0 %1021
        %v1024 = vmul.f32 %v1018, %v1022
        %1025 = vset.pattern.permute.xlu0 1
        %1026 = vperm.xlu0 %1025, %v1017
        %v1027 = vpop.permute.xlu0 %1026
        %v1029 = vmul.f32 %v1018, %v1027
        %1030 = vset.pattern.permute.xlu0 2
        %1031 = vperm.xlu0 %1030, %v1017
        %v1032 = vpop.permute.xlu0 %1031
        %v1034 = vmul.f32 %v1018, %v1032
        %1035 = vset.pattern.permute.xlu0 3
        %1036 = vperm.xlu0 %1035, %v1017
        %v1037 = vpop.permute.xlu0 %1036
        %v1039 = vmul.f32 %v1018, %v1037
        %v1040 = vsel %vm279, %v1024, %v1029
        %v1041 = vsel %vm1004, %v1040, %v1034
        %v1042 = vsel %vm1006, %v1041, %v1039
        %1043 = vst.msk [vmem:[%s265] sm:$0xff] %vm1008, %v1042
      $region40: #{multi_head_attention.4} parent=31 // pred_fallthru
        _
      %p1044 = scmp.lt.s32.totalorder %s19, 1
      %s1045 = scalar_select %p1044, %s19, 1
      %p1046 = scmp.lt.s32.totalorder %s20, 0
      %s1047 = scalar_select %p1046, %s20, 0
      %s1048 = sadd.s32 %s1047, %s1045
      %s1049 = smul.addr %s1048, 8
      %s1050 = scalar_lea.vmem %s3, %s1049
      // Predicated region
      $region41: #{multi_head_attention.4} parent=31 // pred_check
        %p1051 = pneg %p137
      $region42: #{multi_head_attention.4} parent=31 // pred_check_branch
        %1053 = sbr.rel (%p1051) target = $region44
      $region43: #{multi_head_attention.4} parent=31 // pred_region
        _
      $region44: #{multi_head_attention.4} parent=31 // pred_fallthru
        _
    $region32: #{multi_head_attention.4} parent=5 // pred_fallthru
      _
    %p1054 = scmp.le.s32.totalorder 2, %s9
    // Predicated region
    $region45: #{multi_head_attention.4} parent=5 // pred_check
      %p1055 = pneg %p1054
    $region46: #{multi_head_attention.4} parent=5 // pred_check_branch
      %1057 = sbr.rel (%p1055) target = $region48
    $region47: #{multi_head_attention.4} parent=5 // pred_region
      %s1058 = ssub.s32 %s9, 2
      // Predicated region
      $region49: #{multi_head_attention.4} parent=47 // pred_check
        %p1059 = pneg %p143
      $region50: #{multi_head_attention.4} parent=47 // pred_check_branch
        %1061 = sbr.rel (%p1059) target = $region52
      $region51: #{multi_head_attention.4} parent=47 // pred_region
        %p1062 = scmp.lt.s32.totalorder %s22, 1
        %s1063 = scalar_select %p1062, %s22, 1
        %p1064 = scmp.lt.s32.totalorder %s23, 0
        %s1065 = scalar_select %p1064, %s23, 0
        %s1066 = sadd.s32 %s1065, %s1063
        %s1067 = smul.addr %s1066, 8
        %s1068 = scalar_lea.vmem %s3, %s1067
      $region52: #{multi_head_attention.4} parent=47 // pred_fallthru
        _
    $region48: #{multi_head_attention.4} parent=5 // pred_fallthru
      _
  $region6: #{multi_head_attention.4} parent=0 // loop_footer
    %s13 = sadd.s32 1, %s9
  $region7: #{multi_head_attention.4} parent=0 // loop_footer_branch
    %8 = sbr.rel target = $region3
  $region8: #{multi_head_attention.4} parent=0 // loop_exit
    _

// kernel: multi_head_attention.5
$region0: #{multi_head_attention.5}
  #allocation0 [shape = 'u32[]', space=smem, size = 0x4, offset = 0x4, fixed_abs, tag = 'smem constant byte address 0x4 - core index']
  #allocation1 [shape = 'u32[144,128]{1,0:T(1,128)}', space=vmem, size = 0x12000, scoped, tag = 'internal scratch']
  #allocation2 [shape = 'f32[16,32]{1,0:T(8,128)}', space=vmem, size = 0x2000, scoped, tag = 'scratch operand']
  %s0 = inlined_call_operand.vmem [shape: f32[16,32], index: 0, kind: input, shape index: {}]
  %s1 = inlined_call_operand.vmem [shape: f32[1,32,32], index: 1, kind: input, shape index: {}]
  %s2 = inlined_call_operand.vmem [shape: f32[1,1,32], index: 2, kind: input, shape index: {}]
  %s3 = inlined_call_operand.hbm [shape: f32[1,16,32], index: 3, kind: output, shape index: {}]
  %s4 = sld [smem:[#allocation0]]
  $region30: #{multi_head_attention.5} parent=0
    _
  %s6 = ssub.s32 1, %s4
  %s7 = scalar_select 0, %s6, %s4
  $region1: #{multi_head_attention.5} parent=0
    #allocation3 [shape = 'u8[8192]{0}', space=vmem, size = 0x2000, scoped, tag = 'output window, operand 0, single buffered']
    #allocation4 [shape = 's32[1]{0}', space=sflag, size = 0x4, scoped, tag = 'scoped memory for multi_head_attention.5']
    %8 = vsyncpa [#allocation4], 0
    // Predicated region
    $region2: #{multi_head_attention.5} parent=1 // pred_check
      _
    $region3: #{multi_head_attention.5} parent=1 // pred_check_branch
      %10 = sbr.rel (0) target = $region5
    $region4: #{multi_head_attention.5} parent=1 // pred_region
      _
    $region5: #{multi_head_attention.5} parent=1 // pred_fallthru
      _
    // Predicated region
    $region6: #{multi_head_attention.5} parent=1 // pred_check
      _
    $region7: #{multi_head_attention.5} parent=1 // pred_check_branch
      %12 = sbr.rel (0) target = $region9
    $region8: #{multi_head_attention.5} parent=1 // pred_region
      _
    $region9: #{multi_head_attention.5} parent=1 // pred_fallthru
      _
    // Predicated region
    $region10: #{multi_head_attention.5} parent=1 // pred_check
      _
    $region11: #{multi_head_attention.5} parent=1 // pred_check_branch
      %14 = sbr.rel (0) target = $region13
    $region12: #{multi_head_attention.5} parent=1 // pred_region
      _
    $region13: #{multi_head_attention.5} parent=1 // pred_fallthru
      _
    %p15 = scmp.eq.s32.totalorder 0, 0
    // Predicated region
    $region14: #{multi_head_attention.5} parent=1 // pred_check
      %p16 = pneg %p15
    $region15: #{multi_head_attention.5} parent=1 // pred_check_branch
      %18 = sbr.rel (%p16) target = $region17
    $region16: #{multi_head_attention.5} parent=1 // pred_region
      %vm19 = vcmask 261120
      %20 = vst.msk [vmem:[#allocation2] sm:$0xff] %vm19, 0.0
      %21 = vst.msk [vmem:[#allocation2 + $0x8] sm:$0xff] %vm19, 0.0
    $region17: #{multi_head_attention.5} parent=1 // pred_fallthru
      _
    %v22 = vld [vmem:[#allocation2] sm:$0xff]
    %v23 = vld [vmem:[#allocation2 + $0x8] sm:$0xff]
    %v24 = vld [vmem:[%s0] sm:$0xff]
    %v25 = vld [vmem:[%s0 + $0x8] sm:$0xff]
    %v26 = vld [vmem:[%s1] sm:$0xff]
    %v27 = vld [vmem:[%s1 + $0x8] sm:$0xff]
    %v28 = vld [vmem:[%s1 + $0x10] sm:$0xff]
    %v29 = vld [vmem:[%s1 + $0x18] sm:$0xff]
    %vm30 = vcmask 261120
    %v32 = vsel %vm30, %v24, 0
    %v35 = vsel %vm30, %v25, 0
    %37 = vmatprep.subr.mxu0 0.0
    %38 = vmatpush1.msra.mxu0 %v26
    %39 = vmatprep.subr.mxu0 0.0
    %40 = vmatpush1.msra.mxu0 %v27
    %41 = vmatprep.subr.mxu0 0.0
    %42 = vmatpush1.msra.mxu0 %v28
    %43 = vmatprep.subr.mxu0 0.0
    %44 = vmatpush1.msra.mxu0 %v29
    %45 = vmatprep.subr.mxu0 0.0
    %46 = vmatpush1.msra.mxu0 0.0
    %47 = vmatprep.subr.mxu0 0.0
    %48 = vmatpush1.msra.mxu0 0.0
    %49 = vmatprep.subr.mxu0 0.0
    %50 = vmatpush1.msra.mxu0 0.0
    %51 = vmatprep.subr.mxu0 0.0
    %52 = vmatpush1.msra.mxu0 0.0
    %53 = vmatprep.subr.mxu0 0.0
    %54 = vmatpush1.msra.mxu0 0.0
    %55 = vmatprep.subr.mxu0 0.0
    %56 = vmatpush1.msra.mxu0 0.0
    %57 = vmatprep.subr.mxu0 0.0
    %58 = vmatpush1.msra.mxu0 0.0
    %59 = vmatprep.subr.mxu0 0.0
    %60 = vmatpush1.msra.mxu0 0.0
    %61 = vmatprep.subr.mxu0 0.0
    %62 = vmatpush1.msra.mxu0 0.0
    %63 = vmatprep.subr.mxu0 0.0
    %64 = vmatpush1.msra.mxu0 0.0
    %65 = vmatprep.subr.mxu0 0.0
    %66 = vmatpush1.msra.mxu0 0.0
    %67 = vmatprep.subr.mxu0 0.0
    %68 = vmatpush1.msra.mxu0 0.0
    %69 = vmatprep.subr.mxu0 0.0
    %70 = vmatpush1.msra.mxu0 0.0
    %71 = vmatprep.subr.mxu0 0.0
    %72 = vmatpush1.msra.mxu0 0.0
    %73 = vmatprep.subr.mxu0 0.0
    %74 = vmatpush1.msra.mxu0 0.0
    %75 = vmatprep.subr.mxu0 0.0
    %76 = vmatpush1.msra.mxu0 0.0
    %77 = vmatprep.subr.mxu0 0.0
    %78 = vmatpush1.msra.mxu0 0.0
    %79 = vmatprep.subr.mxu0 0.0
    %80 = vmatpush1.msra.mxu0 0.0
    %81 = vmatprep.subr.mxu0 0.0
    %82 = vmatpush1.msra.mxu0 0.0
    %83 = vmatprep.subr.mxu0 0.0
    %84 = vmatpush1.msra.mxu0 0.0
    %85 = vmatprep.subr.mxu0 0.0
    %86 = vmatpush1.msra.mxu0 0.0
    %87 = vmatprep.subr.mxu0 0.0
    %88 = vmatpush1.msra.mxu0 0.0
    %89 = vmatprep.subr.mxu0 0.0
    %90 = vmatpush1.msra.mxu0 0.0
    %91 = vmatprep.subr.mxu0 0.0
    %92 = vmatpush1.msra.mxu0 0.0
    %93 = vmatprep.subr.mxu0 0.0
    %94 = vmatpush1.msra.mxu0 0.0
    %95 = vmatprep.subr.mxu0 0.0
    %96 = vmatpush1.msra.mxu0 0.0
    %97 = vmatprep.subr.mxu0 0.0
    %98 = vmatpush1.msra.mxu0 0.0
    %99 = vmatprep.subr.mxu0 0.0
    %100 = vmatpush1.msra.mxu0 0.0
    %101 = vmatprep.mubr.f32.mxu0 0.0
    %102 = vmatmul.mubr.f32.gmra.mrb[0].mxu0 %v32
    %v103 = vpop.f32.mrb[0].mxu0
    %v104 = vadd.f32 0.0, %v103
    %v105 = vpop.f32.mrb[0].mxu0
    %106 = vmatprep.mubr.f32.mxu0 0.0
    %107 = vmatmul.mubr.f32.gmra.mrb[0].mxu0 %v35
    %v108 = vpop.f32.mrb[0].mxu0
    %v109 = vadd.f32 0.0, %v108
    %v110 = vpop.f32.mrb[0].mxu0
    %111 = vdwg.mxu0
    %v112 = vadd.f32 %v22, %v104
    %v113 = vadd.f32 %v23, %v109
    %114 = vst.msk [vmem:[#allocation2] sm:$0xff] %vm30, %v112
    %115 = vst.msk [vmem:[#allocation2 + $0x8] sm:$0xff] %vm30, %v113
    // Predicated region
    $region18: #{multi_head_attention.5} parent=1 // pred_check
      %p116 = pneg %p15
    $region19: #{multi_head_attention.5} parent=1 // pred_check_branch
      %118 = sbr.rel (%p116) target = $region21
    $region20: #{multi_head_attention.5} parent=1 // pred_region
      %v119 = vld [vmem:[#allocation2] sm:$0xff]
      %v120 = vld [vmem:[#allocation2 + $0x8] sm:$0xff]
      %v121 = vld [vmem:[%s2] sm:$0x1]
      %v123 = vlaneseq
      %v124 = vshrl.u32 %v123, 7
      %v125 = vsub.s32 0, %v124
      %v126 = vrot.slane %v121, %v125
      %v128 = vadd.f32 %v119, %v126
      %v129 = vadd.f32 %v120, %v126
      %130 = vst.msk [vmem:[#allocation3] sm:$0xff] %vm30, %v128
      %131 = vst.msk [vmem:[#allocation3 + $0x8] sm:$0xff] %vm30, %v129
    $region21: #{multi_head_attention.5} parent=1 // pred_fallthru
      _
    // Predicated region
    $region22: #{multi_head_attention.5} parent=1 // pred_check
      _
    $region23: #{multi_head_attention.5} parent=1 // pred_check_branch
      %133 = sbr.rel (0) target = $region25
    $region24: #{multi_head_attention.5} parent=1 // pred_region
      %s135 = ssub.s32 256, 256
      %136 = vsyncadd [#allocation4], %s135
      %s137 = sshll.u32 [#allocation3], 4
      %s138 = int_to_ptr.vmem [resolvable:$true] %s137
      %143 = dma.vmem_to_hbm [thread:$0]  %s138, 256, %s3, [#allocation4], 128, 128, 8
    $region25: #{multi_head_attention.5} parent=1 // pred_fallthru
      _
    // Predicated region
    $region26: #{multi_head_attention.5} parent=1 // pred_check
      _
    $region27: #{multi_head_attention.5} parent=1 // pred_check_branch
      %145 = sbr.rel (0) target = $region29
    $region28: #{multi_head_attention.5} parent=1 // pred_region
      %146 = dma.done [#allocation4], 256
    $region29: #{multi_head_attention.5} parent=1 // pred_fallthru
      _
    %147 = vsyncpa [#allocation4], 1

</llo_original>
